<compile_context>
chip_gen: v5e
topology: v5e:2x2
jax: 0.10.0
libtpu: 0.0.40
codegen_flags: <defaults>
</compile_context>

<pallas_src>
import functools
import numpy as np

import jax
import jax.numpy as jnp
from jax import lax
from jax.experimental import pallas as pl
from jax.experimental.pallas import tpu as pltpu

NUM_HEADS = 4


# ------------------------------------------------------------------ kernels -----------
def _qkv_dwconv_kernel(x_ref, wq_ref, wdw_ref, mask_ref, o_ref, *, H, W):
    """qkv 1x1 conv (MXU, bf16) fused with the 3x3 depthwise conv (VPU + XLU rolls).

    x_ref   : (1, C, HW)   input, channel-first, f32
    wq_ref  : (3C, C)      qkv pointwise weight, bf16
    wdw_ref : (3C, 9)      depthwise 3x3 weight, tap-major (t = ky*3 + kx), f32
    mask_ref: (9, HW)      1.0 where the tap's neighbour is inside the image
    o_ref   : (1, 3C, HW)  qkv after the depthwise conv, bf16
    """
    HW = H * W
    qkv = jnp.dot(wq_ref[...], x_ref[0].astype(jnp.bfloat16),
                  preferred_element_type=jnp.float32)                 # (3C, HW) f32

    # centre tap (no shift, always valid)
    acc = qkv * wdw_ref[:, 4:5]
    for t in range(9):
        if t == 4:
            continue
        ddy, ddx = t // 3 - 1, t % 3 - 1
        d = ddy * W + ddx                       # tap[p] = qkv[p + d] (when in-image)
        rolled = pltpu.roll(qkv, shift=(-d) % HW, axis=1)
        acc = acc + rolled * mask_ref[t:t + 1, :] * wdw_ref[:, t:t + 1]
    o_ref[0] = acc.astype(jnp.bfloat16)


def _conv_attn_kernel(qkv_ref, f2_ref, wfcT_ref, bfc_ref, wdep_ref, bdep_ref,
                      wp_ref, temp_ref, abias_ref, mask_ref, o_ref, *, H, W, C):
    """Conv branch (fc + grouped 3x3 dep_conv) + channel attention + project_out
    + residual add, fused.  Output is channel-first (C, HW) == flattened NCHW.

    qkv_ref : (1, 3C, HW) bf16   channel-first view of the qkv/dwconv intermediate
    f2_ref  : (1, HW, 3C) bf16   flat-reshape view of the same buffer (fc feed)
    wfcT_ref: (NC, 3C)    bf16   fc weight, pre-expanded for the flat-reshape feed
    wdep_ref: (9C, NC)    bf16   grouped dep_conv weight, taps stacked on output rows
    wp_ref  : (C, C)      bf16   project_out weight
    """
    HW = H * W
    b16 = jnp.bfloat16
    f32 = jnp.float32

    # ---------------- convolutional branch -------------------------------------------
    # fc (1x1x1 over the 3*heads axis): one A @ B^T matmul against the flat view.
    fcv = lax.dot_general(wfcT_ref[...], f2_ref[0],
                          (((1,), (1,)), ((), ())),
                          preferred_element_type=f32)                  # (NC, HW)
    fcv = fcv + bfc_ref[...]
    fcv16 = fcv.astype(b16)                                            # single hoisted cast

    # grouped 3x3 dep_conv: ONE (9C, NC)x(NC, HW) MXU matmul (taps on output rows),
    # then roll the small (C, HW) output slices per tap and mask the image edges.
    y = jnp.dot(wdep_ref[...], fcv16, preferred_element_type=f32)      # (9C, HW)
    out_conv = bdep_ref[...] + y[4 * C:5 * C, :]                       # centre tap
    for t in range(9):
        if t == 4:
            continue
        ddy, ddx = t // 3 - 1, t % 3 - 1
        d = ddy * W + ddx
        yt = pltpu.roll(y[t * C:(t + 1) * C, :], shift=(-d) % HW, axis=1)
        out_conv = out_conv + yt * mask_ref[t:t + 1, :]

    # ---------------- attention branch (all heads batched) ---------------------------
    qkv = qkv_ref[0]                                                   # (3C, HW) bf16
    q = qkv[0:C, :].astype(f32)
    k = qkv[C:2 * C, :].astype(f32)
    v16 = qkv[2 * C:3 * C, :]

    qn = (q * lax.rsqrt(jnp.maximum(jnp.sum(q * q, axis=1, keepdims=True), 1e-24))
          ).astype(b16)
    kn = (k * lax.rsqrt(jnp.maximum(jnp.sum(k * k, axis=1, keepdims=True), 1e-24))
          ).astype(b16)

    # all-head Gram in one MXU call; off-head blocks masked out before the softmax.
    s = lax.dot_general(qn, kn, (((1,), (1,)), ((), ())),
                        preferred_element_type=f32)                    # (C, C) f32
    s = s * temp_ref[...] + abias_ref[...]
    s = s - jnp.max(s, axis=1, keepdims=True)
    e = jnp.exp(s)
    attn = e * pl.reciprocal(jnp.sum(e, axis=1, keepdims=True), approx=True)

    # project_out folded into the attention application: (wp @ attn) @ v, bf16 MXU.
    pa = jnp.dot(wp_ref[...], attn.astype(b16), preferred_element_type=f32)   # (C, C)
    attn_out = jnp.dot(pa.astype(b16), v16, preferred_element_type=f32)       # (C, HW)

    o_ref[0] = attn_out + out_conv


# ------------------------------------------------------------ pallas_call wrappers ----
def _padded_block_bytes(shape, dtype):
    itemsize = jnp.dtype(dtype).itemsize
    s = [int(d) for d in shape]
    s[-1] = -(-s[-1] // 128) * 128
    if len(s) >= 2:
        sub = 8 * max(1, 4 // itemsize)          # 8 sublanes f32, 16 bf16
        s[-2] = -(-s[-2] // sub) * sub
    n = 1
    for d in s:
        n *= d
    return n * itemsize


def _mosaic_params(blocks):
    """Derive vmem_limit_bytes from actual block bytes (double-buffer + headroom)."""
    per_step = sum(_padded_block_bytes(s, d) for s, d in blocks)
    limit = int(min(2 * per_step + (8 << 20), 100 << 20))
    return pltpu.CompilerParams(dimension_semantics=("parallel",),
                                vmem_limit_bytes=limit)


def qkv_dwconv(x_cf, wq16, wdw_cf, tapmask, *, H, W):
    B, C, HW = x_cf.shape
    C3 = wq16.shape[0]
    blocks = [((1, C, HW), x_cf.dtype), ((C3, C), wq16.dtype),
              ((C3, 9), wdw_cf.dtype), ((9, HW), tapmask.dtype),
              ((1, C3, HW), jnp.bfloat16)]
    return pl.pallas_call(
        functools.partial(_qkv_dwconv_kernel, H=H, W=W),
        out_shape=jax.ShapeDtypeStruct((B, C3, HW), jnp.bfloat16),
        grid=(B,),
        in_specs=[pl.BlockSpec((1, C, HW), lambda b: (b, 0, 0)),
                  pl.BlockSpec((C3, C), lambda b: (0, 0)),
                  pl.BlockSpec((C3, 9), lambda b: (0, 0)),
                  pl.BlockSpec((9, HW), lambda b: (0, 0))],
        out_specs=pl.BlockSpec((1, C3, HW), lambda b: (b, 0, 0)),
        compiler_params=_mosaic_params(blocks),
    )(x_cf, wq16, wdw_cf, tapmask)


def conv_attn(qkv_bf, f2, p, *, H, W):
    B, C3, HW = qkv_bf.shape
    C = C3 // 3
    NC = p["wfcT16"].shape[0]                    # 9 * (C // heads)
    blocks = [((1, C3, HW), qkv_bf.dtype), ((1, HW, C3), f2.dtype),
              ((NC, C3), jnp.bfloat16), ((NC, 1), jnp.float32),
              ((9 * C, NC), jnp.bfloat16), ((C, 1), jnp.float32),
              ((C, C), jnp.bfloat16), ((C, 1), jnp.float32),
              ((C, C), jnp.float32), ((9, HW), jnp.float32),
              ((1, C, HW), jnp.float32)]
    return pl.pallas_call(
        functools.partial(_conv_attn_kernel, H=H, W=W, C=C),
        out_shape=jax.ShapeDtypeStruct((B, C, HW), jnp.float32),
        grid=(B,),
        in_specs=[pl.BlockSpec((1, C3, HW), lambda b: (b, 0, 0)),
                  pl.BlockSpec((1, HW, C3), lambda b: (b, 0, 0)),
                  pl.BlockSpec((NC, C3), lambda b: (0, 0)),
                  pl.BlockSpec((NC, 1), lambda b: (0, 0)),
                  pl.BlockSpec((9 * C, NC), lambda b: (0, 0)),
                  pl.BlockSpec((C, 1), lambda b: (0, 0)),
                  pl.BlockSpec((C, C), lambda b: (0, 0)),
                  pl.BlockSpec((C, 1), lambda b: (0, 0)),
                  pl.BlockSpec((C, C), lambda b: (0, 0)),
                  pl.BlockSpec((9, HW), lambda b: (0, 0))],
        out_specs=pl.BlockSpec((1, C, HW), lambda b: (b, 0, 0)),
        compiler_params=_mosaic_params(blocks),
    )(qkv_bf, f2, p["wfcT16"], p["bfc_cf"], p["wdep_all16"], p["bdep_cf"],
      p["wp16"], p["temp_rows"], p["abias"], p["tapmask"])


# ------------------------------------------------------------------ full forward ------
@jax.jit
def cafm_forward(x_nchw, params):
    B, C, H, W = x_nchw.shape
    HW = H * W
    x_cf = x_nchw.reshape(B, C, HW)                       # flattened NCHW (metadata only)
    qkv_bf = qkv_dwconv(x_cf, params["wq16"], params["wdw_cf"], params["tapmask"],
                        H=H, W=W)                         # (B, 3C, HW) bf16
    # faithful reproduction of the PyTorch flat-memory reshape feeding the fc branch
    f2 = qkv_bf.reshape(B, HW, 3 * C)                     # metadata-only reinterpretation
    out_cf = conv_attn(qkv_bf, f2, params, H=H, W=W)      # (B, C, HW) f32
    return out_cf.reshape(B, C, H, W)


# ------------------------------------------------------------------ parameters --------
def init_params(key, C, heads, H, W):
    assert C % heads == 0
    cph = C // heads
    NC = 9 * cph
    HW = H * W
    keys = jax.random.split(key, 8)
    rnd = lambda k, shape: 0.1 * jax.random.normal(k, shape, jnp.float32)

    wq = rnd(keys[0], (3 * C, C))                   # qkv (1x1x1) weight (O, I)
    wdw_full = rnd(keys[1], (3 * C, 1, 3, 3, 3))    # depthwise 3x3x3
    wp = rnd(keys[2], (C, C))                       # project_out (1x1x1)
    wfc = rnd(keys[3], (9, 3 * heads))              # fc (1x1x1)
    bfc = rnd(keys[4], (9,))
    wdep_full = rnd(keys[5], (C, 9, 3, 3, 3))       # grouped 3x3x3
    bdep = rnd(keys[6], (C,))
    temperature = 1.0 + 0.1 * jax.random.normal(keys[7], (heads,), jnp.float32)

    # ---------------- kernel-side layouts (numpy precompute) ----------------
    # depthwise 3x3 (middle depth slice of the 3x3x3 kernel, since depth == 1)
    wdw_cf = np.asarray(wdw_full[:, 0, 1]).reshape(3 * C, 9)          # (3C, 9)

    # fc weight expanded so fcv[o*9+j] = wfcT @ f2^T reproduces the flat-reshape feed
    wfc_np = np.asarray(wfc)
    bfc_np = np.asarray(bfc)
    wfcT = np.zeros((NC, 3 * C), np.float32)
    bfc_cf = np.zeros((NC, 1), np.float32)
    for o in range(cph):
        bfc_cf[o * 9:(o + 1) * 9, 0] = bfc_np
        for j in range(9):
            for e in range(3 * heads):
                wfcT[o * 9 + j, e * cph + o] = wfc_np[j, e]

    # grouped dep_conv weight, taps stacked along the OUTPUT-row axis: (9C, NC)
    wdep_mid = np.asarray(wdep_full[:, :, 1])                         # (C, 9, 3, 3)
    wdep_all = np.zeros((9 * C, NC), np.float32)
    for t in range(9):
        ky, kx = t // 3, t % 3
        for oc in range(C):
            g = oc // heads
            for j in range(9):
                wdep_all[t * C + oc, 9 * g + j] = wdep_mid[oc, j, ky, kx]
    bdep_cf = np.asarray(bdep).reshape(C, 1)

    # per-row temperature and block-diagonal additive softmax mask
    hid = np.repeat(np.arange(heads), cph)
    temp_rows = np.asarray(temperature)[hid].reshape(C, 1).astype(np.float32)
    abias = np.where(hid[:, None] == hid[None, :], 0.0, -1e30).astype(np.float32)

    # 3x3 tap validity mask over flattened spatial positions (zero padding semantics)
    yy, xx = np.meshgrid(np.arange(H), np.arange(W), indexing="ij")
    yy = yy.reshape(-1)
    xx = xx.reshape(-1)
    tapmask = np.zeros((9, HW), np.float32)
    for t in range(9):
        ddy, ddx = t // 3 - 1, t % 3 - 1
        tapmask[t] = ((yy + ddy >= 0) & (yy + ddy < H) &
                      (xx + ddx >= 0) & (xx + ddx < W)).astype(np.float32)

    return dict(
        # torch-layout (for the reference)
        wq=wq, wdw_full=wdw_full, wp=wp, wfc=wfc, bfc_vec=bfc,
        wdep_full=wdep_full, bdep_vec=bdep, temperature=temperature,
        # kernel-layout (bf16 for MXU operands, f32 for additive / VPU terms)
        wq16=wq.astype(jnp.bfloat16),
        wdw_cf=jnp.asarray(wdw_cf),
        wfcT16=jnp.asarray(wfcT).astype(jnp.bfloat16),
        bfc_cf=jnp.asarray(bfc_cf),
        wdep_all16=jnp.asarray(wdep_all).astype(jnp.bfloat16),
        bdep_cf=jnp.asarray(bdep_cf),
        wp16=wp.astype(jnp.bfloat16),
        temp_rows=jnp.asarray(temp_rows),
        abias=jnp.asarray(abias),
        tapmask=jnp.asarray(tapmask),
    )


# ------------------------------------------------------------------ plain-JAX ref -----
def cafm_reference(x, p):
    B, C, H, W = x.shape
    heads = NUM_HEADS
    cph = C // heads
    HW = H * W
    hi = lax.Precision.HIGHEST
    dn = ("NCHW", "OIHW", "NCHW")

    qkv = lax.conv_general_dilated(x, p["wq"][:, :, None, None], (1, 1), "VALID",
                                   dimension_numbers=dn, precision=hi)
    qkv = lax.conv_general_dilated(qkv, p["wdw_full"][:, :, 1], (1, 1), ((1, 1), (1, 1)),
                                   dimension_numbers=dn, feature_group_count=3 * C,
                                   precision=hi)
    f_all = qkv.reshape(B, HW, 3 * heads, cph).transpose(0, 2, 1, 3)
    f_all = (jnp.einsum("og,bgpe->bope", p["wfc"], f_all, precision=hi)
             + p["bfc_vec"][None, :, None, None])
    f_conv = f_all.transpose(0, 3, 1, 2).reshape(B, 9 * cph, H, W)
    out_conv = lax.conv_general_dilated(f_conv, p["wdep_full"][:, :, 1], (1, 1),
                                        ((1, 1), (1, 1)), dimension_numbers=dn,
                                        feature_group_count=cph, precision=hi)
    out_conv = out_conv + p["bdep_vec"][None, :, None, None]

    q, k, v = jnp.split(qkv, 3, axis=1)
    q = q.reshape(B, heads, cph, HW)
    k = k.reshape(B, heads, cph, HW)
    v = v.reshape(B, heads, cph, HW)
    l2n = lambda t: t / jnp.maximum(
        jnp.sqrt(jnp.sum(t * t, axis=-1, keepdims=True)), 1e-12)
    q, k = l2n(q), l2n(k)
    attn = jnp.einsum("bhcp,bhdp->bhcd", q, k, precision=hi)
    attn = attn * p["temperature"][None, :, None, None]
    attn = jax.nn.softmax(attn, axis=-1)
    out = jnp.einsum("bhcd,bhdp->bhcp", attn, v, precision=hi).reshape(B, C, H, W)
    out = lax.conv_general_dilated(out, p["wp"][:, :, None, None], (1, 1), "VALID",
                                   dimension_numbers=dn, precision=hi)
    return out + out_conv


# ------------------------------------------------------------------ main --------------
if __name__ == "__main__":
    B, C, H, W = 2, 16, 16, 16          # dim must be divisible by num_heads (=4)
    x = jax.random.normal(jax.random.PRNGKey(0), (B, C, H, W), jnp.float32)
    params = init_params(jax.random.PRNGKey(1), C, NUM_HEADS, H, W)

    out = jax.block_until_ready(cafm_forward(x, params))
    assert out.shape == (B, C, H, W)

    ref = cafm_reference(x, params)
    # bf16 MXU operands + bf16 qkv intermediate vs. an f32 HIGHEST-precision reference,
    # hence the loose tolerance (gross bugs would show up as O(0.1) errors).
    np.testing.assert_allclose(np.asarray(out), np.asarray(ref), rtol=4e-2, atol=4e-2)

    print("KERNEL_OK")
</pallas_src>

<mosaic_0001>
module attributes {stable_mosaic.version = 11 : i64} {
  func.func @_qkv_dwconv_kernel(%arg0: i32, %arg1: memref<1x16x256xf32, #tpu.memory_space<vmem>>, %arg2: memref<48x16xbf16, #tpu.memory_space<vmem>>, %arg3: memref<48x9xf32, #tpu.memory_space<vmem>>, %arg4: memref<9x256xf32, #tpu.memory_space<vmem>>, %arg5: memref<1x48x256xbf16, #tpu.memory_space<vmem>>) attributes {dimension_semantics = [#tpu.dimension_semantics<parallel>], iteration_bounds = array<i64: 2>, scalar_prefetch = 0 : i64, scratch_operands = 0 : i64, tpu.core_type = #tpu.core_type<tc>, window_params = [{transform_indices = @transform_0, window_bounds = array<i64: 1, 16, 256>}, {pipeline_mode = #tpu.pipeline_mode<synchronous>, transform_indices = @transform_1, window_bounds = array<i64: 48, 16>}, {pipeline_mode = #tpu.pipeline_mode<synchronous>, transform_indices = @transform_2, window_bounds = array<i64: 48, 9>}, {pipeline_mode = #tpu.pipeline_mode<synchronous>, transform_indices = @transform_3, window_bounds = array<i64: 9, 256>}, {transform_indices = @transform_4, window_bounds = array<i64: 1, 48, 256>}]} {
    %c0 = arith.constant 0 : index
    %c0_0 = arith.constant 0 : index
    %0 = vector.load %arg2[%c0, %c0_0] : memref<48x16xbf16, #tpu.memory_space<vmem>>, vector<48x16xbf16>
    %c0_1 = arith.constant 0 : index
    %c0_2 = arith.constant 0 : index
    %c0_3 = arith.constant 0 : index
    %1 = vector.load %arg1[%c0_1, %c0_2, %c0_3] : memref<1x16x256xf32, #tpu.memory_space<vmem>>, vector<1x16x256xf32>
    %2 = vector.shape_cast %1 : vector<1x16x256xf32> to vector<16x256xf32>
    %3 = arith.truncf %2 : vector<16x256xf32> to vector<16x256xbf16>
    %cst = arith.constant dense<0.000000e+00> : vector<48x256xf32>
    %4 = tpu.matmul %0, %3, %cst {dimension_numbers = #tpu.dot_dimension_numbers<[1], [0], [0], [1], [0, 0, 1, 1], [], []>} : vector<48x16xbf16>, vector<16x256xbf16>, vector<48x256xf32> -> vector<48x256xf32>
    %c0_4 = arith.constant 0 : index
    %c4 = arith.constant 4 : index
    %5 = vector.load %arg3[%c0_4, %c4] : memref<48x9xf32, #tpu.memory_space<vmem>>, vector<48x1xf32>
    %6 = vector.broadcast %5 : vector<48x1xf32> to vector<48x256xf32>
    %7 = arith.mulf %4, %6 : vector<48x256xf32>
    %c17_i32 = arith.constant 17 : i32
    %8 = tpu.dynamic_rotate %4 by %c17_i32 dim 1 : vector<48x256xf32>, i32 -> vector<48x256xf32>
    %c0_5 = arith.constant 0 : index
    %c0_6 = arith.constant 0 : index
    %9 = vector.load %arg4[%c0_5, %c0_6] : memref<9x256xf32, #tpu.memory_space<vmem>>, vector<1x256xf32>
    %10 = vector.broadcast %9 : vector<1x256xf32> to vector<48x256xf32>
    %11 = arith.mulf %8, %10 : vector<48x256xf32>
    %c0_7 = arith.constant 0 : index
    %c0_8 = arith.constant 0 : index
    %12 = vector.load %arg3[%c0_7, %c0_8] : memref<48x9xf32, #tpu.memory_space<vmem>>, vector<48x1xf32>
    %13 = vector.broadcast %12 : vector<48x1xf32> to vector<48x256xf32>
    %14 = arith.mulf %11, %13 : vector<48x256xf32>
    %15 = arith.addf %7, %14 : vector<48x256xf32>
    %c16_i32 = arith.constant 16 : i32
    %16 = tpu.dynamic_rotate %4 by %c16_i32 dim 1 : vector<48x256xf32>, i32 -> vector<48x256xf32>
    %c1 = arith.constant 1 : index
    %c0_9 = arith.constant 0 : index
    %17 = vector.load %arg4[%c1, %c0_9] : memref<9x256xf32, #tpu.memory_space<vmem>>, vector<1x256xf32>
    %18 = vector.broadcast %17 : vector<1x256xf32> to vector<48x256xf32>
    %19 = arith.mulf %16, %18 : vector<48x256xf32>
    %c0_10 = arith.constant 0 : index
    %c1_11 = arith.constant 1 : index
    %20 = vector.load %arg3[%c0_10, %c1_11] : memref<48x9xf32, #tpu.memory_space<vmem>>, vector<48x1xf32>
    %21 = vector.broadcast %20 : vector<48x1xf32> to vector<48x256xf32>
    %22 = arith.mulf %19, %21 : vector<48x256xf32>
    %23 = arith.addf %15, %22 : vector<48x256xf32>
    %c15_i32 = arith.constant 15 : i32
    %24 = tpu.dynamic_rotate %4 by %c15_i32 dim 1 : vector<48x256xf32>, i32 -> vector<48x256xf32>
    %c2 = arith.constant 2 : index
    %c0_12 = arith.constant 0 : index
    %25 = vector.load %arg4[%c2, %c0_12] : memref<9x256xf32, #tpu.memory_space<vmem>>, vector<1x256xf32>
    %26 = vector.broadcast %25 : vector<1x256xf32> to vector<48x256xf32>
    %27 = arith.mulf %24, %26 : vector<48x256xf32>
    %c0_13 = arith.constant 0 : index
    %c2_14 = arith.constant 2 : index
    %28 = vector.load %arg3[%c0_13, %c2_14] : memref<48x9xf32, #tpu.memory_space<vmem>>, vector<48x1xf32>
    %29 = vector.broadcast %28 : vector<48x1xf32> to vector<48x256xf32>
    %30 = arith.mulf %27, %29 : vector<48x256xf32>
    %31 = arith.addf %23, %30 : vector<48x256xf32>
    %c1_i32 = arith.constant 1 : i32
    %32 = tpu.dynamic_rotate %4 by %c1_i32 dim 1 : vector<48x256xf32>, i32 -> vector<48x256xf32>
    %c3 = arith.constant 3 : index
    %c0_15 = arith.constant 0 : index
    %33 = vector.load %arg4[%c3, %c0_15] : memref<9x256xf32, #tpu.memory_space<vmem>>, vector<1x256xf32>
    %34 = vector.broadcast %33 : vector<1x256xf32> to vector<48x256xf32>
    %35 = arith.mulf %32, %34 : vector<48x256xf32>
    %c0_16 = arith.constant 0 : index
    %c3_17 = arith.constant 3 : index
    %36 = vector.load %arg3[%c0_16, %c3_17] : memref<48x9xf32, #tpu.memory_space<vmem>>, vector<48x1xf32>
    %37 = vector.broadcast %36 : vector<48x1xf32> to vector<48x256xf32>
    %38 = arith.mulf %35, %37 : vector<48x256xf32>
    %39 = arith.addf %31, %38 : vector<48x256xf32>
    %c255_i32 = arith.constant 255 : i32
    %40 = tpu.dynamic_rotate %4 by %c255_i32 dim 1 : vector<48x256xf32>, i32 -> vector<48x256xf32>
    %c5 = arith.constant 5 : index
    %c0_18 = arith.constant 0 : index
    %41 = vector.load %arg4[%c5, %c0_18] : memref<9x256xf32, #tpu.memory_space<vmem>>, vector<1x256xf32>
    %42 = vector.broadcast %41 : vector<1x256xf32> to vector<48x256xf32>
    %43 = arith.mulf %40, %42 : vector<48x256xf32>
    %c0_19 = arith.constant 0 : index
    %c5_20 = arith.constant 5 : index
    %44 = vector.load %arg3[%c0_19, %c5_20] : memref<48x9xf32, #tpu.memory_space<vmem>>, vector<48x1xf32>
    %45 = vector.broadcast %44 : vector<48x1xf32> to vector<48x256xf32>
    %46 = arith.mulf %43, %45 : vector<48x256xf32>
    %47 = arith.addf %39, %46 : vector<48x256xf32>
    %c241_i32 = arith.constant 241 : i32
    %48 = tpu.dynamic_rotate %4 by %c241_i32 dim 1 : vector<48x256xf32>, i32 -> vector<48x256xf32>
    %c6 = arith.constant 6 : index
    %c0_21 = arith.constant 0 : index
    %49 = vector.load %arg4[%c6, %c0_21] : memref<9x256xf32, #tpu.memory_space<vmem>>, vector<1x256xf32>
    %50 = vector.broadcast %49 : vector<1x256xf32> to vector<48x256xf32>
    %51 = arith.mulf %48, %50 : vector<48x256xf32>
    %c0_22 = arith.constant 0 : index
    %c6_23 = arith.constant 6 : index
    %52 = vector.load %arg3[%c0_22, %c6_23] : memref<48x9xf32, #tpu.memory_space<vmem>>, vector<48x1xf32>
    %53 = vector.broadcast %52 : vector<48x1xf32> to vector<48x256xf32>
    %54 = arith.mulf %51, %53 : vector<48x256xf32>
    %55 = arith.addf %47, %54 : vector<48x256xf32>
    %c240_i32 = arith.constant 240 : i32
    %56 = tpu.dynamic_rotate %4 by %c240_i32 dim 1 : vector<48x256xf32>, i32 -> vector<48x256xf32>
    %c7 = arith.constant 7 : index
    %c0_24 = arith.constant 0 : index
    %57 = vector.load %arg4[%c7, %c0_24] : memref<9x256xf32, #tpu.memory_space<vmem>>, vector<1x256xf32>
    %58 = vector.broadcast %57 : vector<1x256xf32> to vector<48x256xf32>
    %59 = arith.mulf %56, %58 : vector<48x256xf32>
    %c0_25 = arith.constant 0 : index
    %c7_26 = arith.constant 7 : index
    %60 = vector.load %arg3[%c0_25, %c7_26] : memref<48x9xf32, #tpu.memory_space<vmem>>, vector<48x1xf32>
    %61 = vector.broadcast %60 : vector<48x1xf32> to vector<48x256xf32>
    %62 = arith.mulf %59, %61 : vector<48x256xf32>
    %63 = arith.addf %55, %62 : vector<48x256xf32>
    %c239_i32 = arith.constant 239 : i32
    %64 = tpu.dynamic_rotate %4 by %c239_i32 dim 1 : vector<48x256xf32>, i32 -> vector<48x256xf32>
    %c8 = arith.constant 8 : index
    %c0_27 = arith.constant 0 : index
    %65 = vector.load %arg4[%c8, %c0_27] : memref<9x256xf32, #tpu.memory_space<vmem>>, vector<1x256xf32>
    %66 = vector.broadcast %65 : vector<1x256xf32> to vector<48x256xf32>
    %67 = arith.mulf %64, %66 : vector<48x256xf32>
    %c0_28 = arith.constant 0 : index
    %c8_29 = arith.constant 8 : index
    %68 = vector.load %arg3[%c0_28, %c8_29] : memref<48x9xf32, #tpu.memory_space<vmem>>, vector<48x1xf32>
    %69 = vector.broadcast %68 : vector<48x1xf32> to vector<48x256xf32>
    %70 = arith.mulf %67, %69 : vector<48x256xf32>
    %71 = arith.addf %63, %70 : vector<48x256xf32>
    %72 = arith.truncf %71 : vector<48x256xf32> to vector<48x256xbf16>
    %c0_30 = arith.constant 0 : index
    %c0_31 = arith.constant 0 : index
    %c0_32 = arith.constant 0 : index
    %73 = vector.load %arg5[%c0_30, %c0_31, %c0_32] : memref<1x48x256xbf16, #tpu.memory_space<vmem>>, vector<1x48x256xbf16>
    %74 = vector.shape_cast %73 : vector<1x48x256xbf16> to vector<48x256xbf16>
    %75 = vector.shape_cast %72 : vector<48x256xbf16> to vector<1x48x256xbf16>
    tpu.vector_store %arg5[%c0_30, %c0_31, %c0_32], %75 {strides = array<i32>} : memref<1x48x256xbf16, #tpu.memory_space<vmem>>, vector<1x48x256xbf16>,
    return
  }
  func.func @transform_0(%arg0: i32) -> (i32, i32, i32) {
    %c0_i32 = arith.constant 0 : i32
    %c0_i32_0 = arith.constant 0 : i32
    %c0_i32_1 = arith.constant 0 : i32
    return %arg0, %c0_i32, %c0_i32_0 : i32, i32, i32
  }
  func.func @transform_1(%arg0: i32) -> (i32, i32) {
    %c0_i32 = arith.constant 0 : i32
    %c0_i32_0 = arith.constant 0 : i32
    %c0_i32_1 = arith.constant 0 : i32
    return %c0_i32, %c0_i32_0 : i32, i32
  }
  func.func @transform_2(%arg0: i32) -> (i32, i32) {
    %c0_i32 = arith.constant 0 : i32
    %c0_i32_0 = arith.constant 0 : i32
    %c0_i32_1 = arith.constant 0 : i32
    return %c0_i32, %c0_i32_0 : i32, i32
  }
  func.func @transform_3(%arg0: i32) -> (i32, i32) {
    %c0_i32 = arith.constant 0 : i32
    %c0_i32_0 = arith.constant 0 : i32
    %c0_i32_1 = arith.constant 0 : i32
    return %c0_i32, %c0_i32_0 : i32, i32
  }
  func.func @transform_4(%arg0: i32) -> (i32, i32, i32) {
    %c0_i32 = arith.constant 0 : i32
    %c0_i32_0 = arith.constant 0 : i32
    %c0_i32_1 = arith.constant 0 : i32
    return %arg0, %c0_i32, %c0_i32_0 : i32, i32, i32
  }
}

module attributes {stable_mosaic.version = 11 : i64} {
  func.func @_conv_attn_kernel(%arg0: i32, %arg1: memref<1x48x256xbf16, #tpu.memory_space<vmem>>, %arg2: memref<1x256x48xbf16, #tpu.memory_space<vmem>>, %arg3: memref<36x48xbf16, #tpu.memory_space<vmem>>, %arg4: memref<36x1xf32, #tpu.memory_space<vmem>>, %arg5: memref<144x36xbf16, #tpu.memory_space<vmem>>, %arg6: memref<16x1xf32, #tpu.memory_space<vmem>>, %arg7: memref<16x16xbf16, #tpu.memory_space<vmem>>, %arg8: memref<16x1xf32, #tpu.memory_space<vmem>>, %arg9: memref<16x16xf32, #tpu.memory_space<vmem>>, %arg10: memref<9x256xf32, #tpu.memory_space<vmem>>, %arg11: memref<1x16x256xf32, #tpu.memory_space<vmem>>) attributes {dimension_semantics = [#tpu.dimension_semantics<parallel>], iteration_bounds = array<i64: 2>, scalar_prefetch = 0 : i64, scratch_operands = 0 : i64, tpu.core_type = #tpu.core_type<tc>, window_params = [{transform_indices = @transform_0, window_bounds = array<i64: 1, 48, 256>}, {transform_indices = @transform_1, window_bounds = array<i64: 1, 256, 48>}, {pipeline_mode = #tpu.pipeline_mode<synchronous>, transform_indices = @transform_2, window_bounds = array<i64: 36, 48>}, {pipeline_mode = #tpu.pipeline_mode<synchronous>, transform_indices = @transform_3, window_bounds = array<i64: 36, 1>}, {pipeline_mode = #tpu.pipeline_mode<synchronous>, transform_indices = @transform_4, window_bounds = array<i64: 144, 36>}, {pipeline_mode = #tpu.pipeline_mode<synchronous>, transform_indices = @transform_5, window_bounds = array<i64: 16, 1>}, {pipeline_mode = #tpu.pipeline_mode<synchronous>, transform_indices = @transform_6, window_bounds = array<i64: 16, 16>}, {pipeline_mode = #tpu.pipeline_mode<synchronous>, transform_indices = @transform_7, window_bounds = array<i64: 16, 1>}, {pipeline_mode = #tpu.pipeline_mode<synchronous>, transform_indices = @transform_8, window_bounds = array<i64: 16, 16>}, {pipeline_mode = #tpu.pipeline_mode<synchronous>, transform_indices = @transform_9, window_bounds = array<i64: 9, 256>}, {transform_indices = @transform_10, window_bounds = array<i64: 1, 16, 256>}]} {
    %c0 = arith.constant 0 : index
    %c0_0 = arith.constant 0 : index
    %0 = vector.load %arg3[%c0, %c0_0] : memref<36x48xbf16, #tpu.memory_space<vmem>>, vector<36x48xbf16>
    %c0_1 = arith.constant 0 : index
    %c0_2 = arith.constant 0 : index
    %c0_3 = arith.constant 0 : index
    %1 = vector.load %arg2[%c0_1, %c0_2, %c0_3] : memref<1x256x48xbf16, #tpu.memory_space<vmem>>, vector<1x256x48xbf16>
    %2 = vector.shape_cast %1 : vector<1x256x48xbf16> to vector<256x48xbf16>
    %cst = arith.constant dense<0.000000e+00> : vector<36x256xf32>
    %3 = tpu.matmul %0, %2, %cst {dimension_numbers = #tpu.dot_dimension_numbers<[1], [1], [0], [0], [0, 0, 1, 0], [], []>} : vector<36x48xbf16>, vector<256x48xbf16>, vector<36x256xf32> -> vector<36x256xf32>
    %c0_4 = arith.constant 0 : index
    %c0_5 = arith.constant 0 : index
    %4 = vector.load %arg4[%c0_4, %c0_5] : memref<36x1xf32, #tpu.memory_space<vmem>>, vector<36x1xf32>
    %5 = vector.broadcast %4 : vector<36x1xf32> to vector<36x256xf32>
    %6 = arith.addf %3, %5 : vector<36x256xf32>
    %7 = arith.truncf %6 : vector<36x256xf32> to vector<36x256xbf16>
    %c0_6 = arith.constant 0 : index
    %c0_7 = arith.constant 0 : index
    %8 = vector.load %arg5[%c0_6, %c0_7] : memref<144x36xbf16, #tpu.memory_space<vmem>>, vector<144x36xbf16>
    %cst_8 = arith.constant dense<0.000000e+00> : vector<144x256xf32>
    %9 = tpu.matmul %8, %7, %cst_8 {dimension_numbers = #tpu.dot_dimension_numbers<[1], [0], [0], [1], [0, 0, 1, 1], [], []>} : vector<144x36xbf16>, vector<36x256xbf16>, vector<144x256xf32> -> vector<144x256xf32>
    %c0_9 = arith.constant 0 : index
    %c0_10 = arith.constant 0 : index
    %10 = vector.load %arg6[%c0_9, %c0_10] : memref<16x1xf32, #tpu.memory_space<vmem>>, vector<16x1xf32>
    %11 = vector.extract_strided_slice %9 {offsets = [64, 0], sizes = [16, 256], strides = [1, 1]} : vector<144x256xf32> to vector<16x256xf32>
    %12 = vector.broadcast %10 : vector<16x1xf32> to vector<16x256xf32>
    %13 = arith.addf %12, %11 : vector<16x256xf32>
    %14 = vector.extract_strided_slice %9 {offsets = [0, 0], sizes = [16, 256], strides = [1, 1]} : vector<144x256xf32> to vector<16x256xf32>
    %c17_i32 = arith.constant 17 : i32
    %15 = tpu.dynamic_rotate %14 by %c17_i32 dim 1 : vector<16x256xf32>, i32 -> vector<16x256xf32>
    %c0_11 = arith.constant 0 : index
    %c0_12 = arith.constant 0 : index
    %16 = vector.load %arg10[%c0_11, %c0_12] : memref<9x256xf32, #tpu.memory_space<vmem>>, vector<1x256xf32>
    %17 = vector.broadcast %16 : vector<1x256xf32> to vector<16x256xf32>
    %18 = arith.mulf %15, %17 : vector<16x256xf32>
    %19 = arith.addf %13, %18 : vector<16x256xf32>
    %20 = vector.extract_strided_slice %9 {offsets = [16, 0], sizes = [16, 256], strides = [1, 1]} : vector<144x256xf32> to vector<16x256xf32>
    %c16_i32 = arith.constant 16 : i32
    %21 = tpu.dynamic_rotate %20 by %c16_i32 dim 1 : vector<16x256xf32>, i32 -> vector<16x256xf32>
    %c1 = arith.constant 1 : index
    %c0_13 = arith.constant 0 : index
    %22 = vector.load %arg10[%c1, %c0_13] : memref<9x256xf32, #tpu.memory_space<vmem>>, vector<1x256xf32>
    %23 = vector.broadcast %22 : vector<1x256xf32> to vector<16x256xf32>
    %24 = arith.mulf %21, %23 : vector<16x256xf32>
    %25 = arith.addf %19, %24 : vector<16x256xf32>
    %26 = vector.extract_strided_slice %9 {offsets = [32, 0], sizes = [16, 256], strides = [1, 1]} : vector<144x256xf32> to vector<16x256xf32>
    %c15_i32 = arith.constant 15 : i32
    %27 = tpu.dynamic_rotate %26 by %c15_i32 dim 1 : vector<16x256xf32>, i32 -> vector<16x256xf32>
    %c2 = arith.constant 2 : index
    %c0_14 = arith.constant 0 : index
    %28 = vector.load %arg10[%c2, %c0_14] : memref<9x256xf32, #tpu.memory_space<vmem>>, vector<1x256xf32>
    %29 = vector.broadcast %28 : vector<1x256xf32> to vector<16x256xf32>
    %30 = arith.mulf %27, %29 : vector<16x256xf32>
    %31 = arith.addf %25, %30 : vector<16x256xf32>
    %32 = vector.extract_strided_slice %9 {offsets = [48, 0], sizes = [16, 256], strides = [1, 1]} : vector<144x256xf32> to vector<16x256xf32>
    %c1_i32 = arith.constant 1 : i32
    %33 = tpu.dynamic_rotate %32 by %c1_i32 dim 1 : vector<16x256xf32>, i32 -> vector<16x256xf32>
    %c3 = arith.constant 3 : index
    %c0_15 = arith.constant 0 : index
    %34 = vector.load %arg10[%c3, %c0_15] : memref<9x256xf32, #tpu.memory_space<vmem>>, vector<1x256xf32>
    %35 = vector.broadcast %34 : vector<1x256xf32> to vector<16x256xf32>
    %36 = arith.mulf %33, %35 : vector<16x256xf32>
    %37 = arith.addf %31, %36 : vector<16x256xf32>
    %38 = vector.extract_strided_slice %9 {offsets = [80, 0], sizes = [16, 256], strides = [1, 1]} : vector<144x256xf32> to vector<16x256xf32>
    %c255_i32 = arith.constant 255 : i32
    %39 = tpu.dynamic_rotate %38 by %c255_i32 dim 1 : vector<16x256xf32>, i32 -> vector<16x256xf32>
    %c5 = arith.constant 5 : index
    %c0_16 = arith.constant 0 : index
    %40 = vector.load %arg10[%c5, %c0_16] : memref<9x256xf32, #tpu.memory_space<vmem>>, vector<1x256xf32>
    %41 = vector.broadcast %40 : vector<1x256xf32> to vector<16x256xf32>
    %42 = arith.mulf %39, %41 : vector<16x256xf32>
    %43 = arith.addf %37, %42 : vector<16x256xf32>
    %44 = vector.extract_strided_slice %9 {offsets = [96, 0], sizes = [16, 256], strides = [1, 1]} : vector<144x256xf32> to vector<16x256xf32>
    %c241_i32 = arith.constant 241 : i32
    %45 = tpu.dynamic_rotate %44 by %c241_i32 dim 1 : vector<16x256xf32>, i32 -> vector<16x256xf32>
    %c6 = arith.constant 6 : index
    %c0_17 = arith.constant 0 : index
    %46 = vector.load %arg10[%c6, %c0_17] : memref<9x256xf32, #tpu.memory_space<vmem>>, vector<1x256xf32>
    %47 = vector.broadcast %46 : vector<1x256xf32> to vector<16x256xf32>
    %48 = arith.mulf %45, %47 : vector<16x256xf32>
    %49 = arith.addf %43, %48 : vector<16x256xf32>
    %50 = vector.extract_strided_slice %9 {offsets = [112, 0], sizes = [16, 256], strides = [1, 1]} : vector<144x256xf32> to vector<16x256xf32>
    %c240_i32 = arith.constant 240 : i32
    %51 = tpu.dynamic_rotate %50 by %c240_i32 dim 1 : vector<16x256xf32>, i32 -> vector<16x256xf32>
    %c7 = arith.constant 7 : index
    %c0_18 = arith.constant 0 : index
    %52 = vector.load %arg10[%c7, %c0_18] : memref<9x256xf32, #tpu.memory_space<vmem>>, vector<1x256xf32>
    %53 = vector.broadcast %52 : vector<1x256xf32> to vector<16x256xf32>
    %54 = arith.mulf %51, %53 : vector<16x256xf32>
    %55 = arith.addf %49, %54 : vector<16x256xf32>
    %56 = vector.extract_strided_slice %9 {offsets = [128, 0], sizes = [16, 256], strides = [1, 1]} : vector<144x256xf32> to vector<16x256xf32>
    %c239_i32 = arith.constant 239 : i32
    %57 = tpu.dynamic_rotate %56 by %c239_i32 dim 1 : vector<16x256xf32>, i32 -> vector<16x256xf32>
    %c8 = arith.constant 8 : index
    %c0_19 = arith.constant 0 : index
    %58 = vector.load %arg10[%c8, %c0_19] : memref<9x256xf32, #tpu.memory_space<vmem>>, vector<1x256xf32>
    %59 = vector.broadcast %58 : vector<1x256xf32> to vector<16x256xf32>
    %60 = arith.mulf %57, %59 : vector<16x256xf32>
    %61 = arith.addf %55, %60 : vector<16x256xf32>
    %c0_20 = arith.constant 0 : index
    %c0_21 = arith.constant 0 : index
    %c0_22 = arith.constant 0 : index
    %62 = vector.load %arg1[%c0_20, %c0_21, %c0_22] : memref<1x48x256xbf16, #tpu.memory_space<vmem>>, vector<1x48x256xbf16>
    %63 = vector.shape_cast %62 : vector<1x48x256xbf16> to vector<48x256xbf16>
    %64 = vector.extract_strided_slice %63 {offsets = [0, 0], sizes = [16, 256], strides = [1, 1]} : vector<48x256xbf16> to vector<16x256xbf16>
    %65 = arith.extf %64 : vector<16x256xbf16> to vector<16x256xf32>
    %66 = vector.extract_strided_slice %63 {offsets = [16, 0], sizes = [16, 256], strides = [1, 1]} : vector<48x256xbf16> to vector<16x256xbf16>
    %67 = arith.extf %66 : vector<16x256xbf16> to vector<16x256xf32>
    %68 = vector.extract_strided_slice %63 {offsets = [32, 0], sizes = [16, 256], strides = [1, 1]} : vector<48x256xbf16> to vector<16x256xbf16>
    %69 = arith.mulf %65, %65 : vector<16x256xf32>
    %cst_23 = arith.constant dense<0.000000e+00> : vector<16xf32>
    %70 = vector.multi_reduction <add>, %69, %cst_23 [1] : vector<16x256xf32> to vector<16xf32>
    %71 = vector.shape_cast %70 : vector<16xf32> to vector<16x1xf32>
    %cst_24 = arith.constant 1.000000e-24 : f32
    %72 = vector.broadcast %cst_24 : f32 to vector<16x1xf32>
    %73 = arith.maximumf %71, %72 : vector<16x1xf32>
    %74 = math.rsqrt %73 : vector<16x1xf32>
    %75 = vector.broadcast %74 : vector<16x1xf32> to vector<16x256xf32>
    %76 = arith.mulf %65, %75 : vector<16x256xf32>
    %77 = arith.truncf %76 : vector<16x256xf32> to vector<16x256xbf16>
    %78 = arith.mulf %67, %67 : vector<16x256xf32>
    %cst_25 = arith.constant dense<0.000000e+00> : vector<16xf32>
    %79 = vector.multi_reduction <add>, %78, %cst_25 [1] : vector<16x256xf32> to vector<16xf32>
    %80 = vector.shape_cast %79 : vector<16xf32> to vector<16x1xf32>
    %cst_26 = arith.constant 1.000000e-24 : f32
    %81 = vector.broadcast %cst_26 : f32 to vector<16x1xf32>
    %82 = arith.maximumf %80, %81 : vector<16x1xf32>
    %83 = math.rsqrt %82 : vector<16x1xf32>
    %84 = vector.broadcast %83 : vector<16x1xf32> to vector<16x256xf32>
    %85 = arith.mulf %67, %84 : vector<16x256xf32>
    %86 = arith.truncf %85 : vector<16x256xf32> to vector<16x256xbf16>
    %cst_27 = arith.constant dense<0.000000e+00> : vector<16x16xf32>
    %87 = tpu.matmul %77, %86, %cst_27 {dimension_numbers = #tpu.dot_dimension_numbers<[1], [1], [0], [0], [0, 0, 1, 0], [], []>} : vector<16x256xbf16>, vector<16x256xbf16>, vector<16x16xf32> -> vector<16x16xf32>
    %c0_28 = arith.constant 0 : index
    %c0_29 = arith.constant 0 : index
    %88 = vector.load %arg8[%c0_28, %c0_29] : memref<16x1xf32, #tpu.memory_space<vmem>>, vector<16x1xf32>
    %89 = vector.broadcast %88 : vector<16x1xf32> to vector<16x16xf32>
    %90 = arith.mulf %87, %89 : vector<16x16xf32>
    %c0_30 = arith.constant 0 : index
    %c0_31 = arith.constant 0 : index
    %91 = vector.load %arg9[%c0_30, %c0_31] : memref<16x16xf32, #tpu.memory_space<vmem>>, vector<16x16xf32>
    %92 = arith.addf %90, %91 : vector<16x16xf32>
    %cst_32 = arith.constant dense<0xFF800000> : vector<16xf32>
    %93 = vector.multi_reduction <maximumf>, %92, %cst_32 [1] : vector<16x16xf32> to vector<16xf32>
    %94 = vector.shape_cast %93 : vector<16xf32> to vector<16x1xf32>
    %95 = vector.broadcast %94 : vector<16x1xf32> to vector<16x16xf32>
    %96 = arith.subf %92, %95 : vector<16x16xf32>
    %97 = math.exp %96 : vector<16x16xf32>
    %cst_33 = arith.constant dense<0.000000e+00> : vector<16xf32>
    %98 = vector.multi_reduction <add>, %97, %cst_33 [1] : vector<16x16xf32> to vector<16xf32>
    %99 = vector.shape_cast %98 : vector<16xf32> to vector<16x1xf32>
    %100 = tpu.reciprocal %99 {approx = true} : vector<16x1xf32> -> vector<16x1xf32>
    %101 = vector.broadcast %100 : vector<16x1xf32> to vector<16x16xf32>
    %102 = arith.mulf %97, %101 : vector<16x16xf32>
    %c0_34 = arith.constant 0 : index
    %c0_35 = arith.constant 0 : index
    %103 = vector.load %arg7[%c0_34, %c0_35] : memref<16x16xbf16, #tpu.memory_space<vmem>>, vector<16x16xbf16>
    %104 = arith.truncf %102 : vector<16x16xf32> to vector<16x16xbf16>
    %cst_36 = arith.constant dense<0.000000e+00> : vector<16x16xf32>
    %105 = tpu.matmul %103, %104, %cst_36 {dimension_numbers = #tpu.dot_dimension_numbers<[1], [0], [0], [1], [0, 0, 1, 1], [], []>} : vector<16x16xbf16>, vector<16x16xbf16>, vector<16x16xf32> -> vector<16x16xf32>
    %106 = arith.truncf %105 : vector<16x16xf32> to vector<16x16xbf16>
    %cst_37 = arith.constant dense<0.000000e+00> : vector<16x256xf32>
    %107 = tpu.matmul %106, %68, %cst_37 {dimension_numbers = #tpu.dot_dimension_numbers<[1], [0], [0], [1], [0, 0, 1, 1], [], []>} : vector<16x16xbf16>, vector<16x256xbf16>, vector<16x256xf32> -> vector<16x256xf32>
    %108 = arith.addf %107, %61 : vector<16x256xf32>
    %c0_38 = arith.constant 0 : index
    %c0_39 = arith.constant 0 : index
    %c0_40 = arith.constant 0 : index
    %109 = vector.load %arg11[%c0_38, %c0_39, %c0_40] : memref<1x16x256xf32, #tpu.memory_space<vmem>>, vector<1x16x256xf32>
    %110 = vector.shape_cast %109 : vector<1x16x256xf32> to vector<16x256xf32>
    %111 = vector.shape_cast %108 : vector<16x256xf32> to vector<1x16x256xf32>
    tpu.vector_store %arg11[%c0_38, %c0_39, %c0_40], %111 {strides = array<i32>} : memref<1x16x256xf32, #tpu.memory_space<vmem>>, vector<1x16x256xf32>,
    return
  }
  func.func @transform_0(%arg0: i32) -> (i32, i32, i32) {
    %c0_i32 = arith.constant 0 : i32
    %c0_i32_0 = arith.constant 0 : i32
    %c0_i32_1 = arith.constant 0 : i32
    return %arg0, %c0_i32, %c0_i32_0 : i32, i32, i32
  }
  func.func @transform_1(%arg0: i32) -> (i32, i32, i32) {
    %c0_i32 = arith.constant 0 : i32
    %c0_i32_0 = arith.constant 0 : i32
    %c0_i32_1 = arith.constant 0 : i32
    return %arg0, %c0_i32, %c0_i32_0 : i32, i32, i32
  }
  func.func @transform_2(%arg0: i32) -> (i32, i32) {
    %c0_i32 = arith.constant 0 : i32
    %c0_i32_0 = arith.constant 0 : i32
    %c0_i32_1 = arith.constant 0 : i32
    return %c0_i32, %c0_i32_0 : i32, i32
  }
  func.func @transform_3(%arg0: i32) -> (i32, i32) {
    %c0_i32 = arith.constant 0 : i32
    %c0_i32_0 = arith.constant 0 : i32
    %c0_i32_1 = arith.constant 0 : i32
    return %c0_i32, %c0_i32_0 : i32, i32
  }
  func.func @transform_4(%arg0: i32) -> (i32, i32) {
    %c0_i32 = arith.constant 0 : i32
    %c0_i32_0 = arith.constant 0 : i32
    %c0_i32_1 = arith.constant 0 : i32
    return %c0_i32, %c0_i32_0 : i32, i32
  }
  func.func @transform_5(%arg0: i32) -> (i32, i32) {
    %c0_i32 = arith.constant 0 : i32
    %c0_i32_0 = arith.constant 0 : i32
    %c0_i32_1 = arith.constant 0 : i32
    return %c0_i32, %c0_i32_0 : i32, i32
  }
  func.func @transform_6(%arg0: i32) -> (i32, i32) {
    %c0_i32 = arith.constant 0 : i32
    %c0_i32_0 = arith.constant 0 : i32
    %c0_i32_1 = arith.constant 0 : i32
    return %c0_i32, %c0_i32_0 : i32, i32
  }
  func.func @transform_7(%arg0: i32) -> (i32, i32) {
    %c0_i32 = arith.constant 0 : i32
    %c0_i32_0 = arith.constant 0 : i32
    %c0_i32_1 = arith.constant 0 : i32
    return %c0_i32, %c0_i32_0 : i32, i32
  }
  func.func @transform_8(%arg0: i32) -> (i32, i32) {
    %c0_i32 = arith.constant 0 : i32
    %c0_i32_0 = arith.constant 0 : i32
    %c0_i32_1 = arith.constant 0 : i32
    return %c0_i32, %c0_i32_0 : i32, i32
  }
  func.func @transform_9(%arg0: i32) -> (i32, i32) {
    %c0_i32 = arith.constant 0 : i32
    %c0_i32_0 = arith.constant 0 : i32
    %c0_i32_1 = arith.constant 0 : i32
    return %c0_i32, %c0_i32_0 : i32, i32
  }
  func.func @transform_10(%arg0: i32) -> (i32, i32, i32) {
    %c0_i32 = arith.constant 0 : i32
    %c0_i32_0 = arith.constant 0 : i32
    %c0_i32_1 = arith.constant 0 : i32
    return %arg0, %c0_i32, %c0_i32_0 : i32, i32, i32
  }
}

</mosaic_0001>

<llo_original>
// kernel: cafm_forward.2
$region0: #{cafm_forward.2}
  #allocation0 [shape = 'u32[]', space=smem, size = 0x4, offset = 0x4, fixed_abs, tag = 'smem constant byte address 0x4 - core index']
  #allocation1 [shape = 'u32[72,128]{1,0:T(1,128)}', space=vmem, size = 0x9000, scoped, tag = 'internal scratch']
  %s0 = inlined_call_operand.vmem [shape: f32[2,16,256], index: 0, kind: input, shape index: {}]
  %s1 = inlined_call_operand.vmem [shape: bf16[48,16], index: 1, kind: input, shape index: {}]
  %s2 = inlined_call_operand.vmem [shape: f32[48,9], index: 2, kind: input, shape index: {}]
  %s3 = inlined_call_operand.vmem [shape: f32[9,256], index: 3, kind: input, shape index: {}]
  %s4 = inlined_call_operand.vmem [shape: bf16[2,48,256], index: 4, kind: output, shape index: {}]
  %s5 = sld [smem:[#allocation0]]
  $region49: #{cafm_forward.2} parent=0
    _
  %s7 = ssub.s32 1, %s5
  %s8 = scalar_select 0, %s7, %s5
  loop: start=0, step=1, limit=4
  $region2: #{cafm_forward.2} parent=0 // loop_pre_header
    _
  $region3: #{cafm_forward.2} parent=0 // loop_header
    %s10 = sphi 0, %s14
    %p11 = scmp.ge.s32.totalorder %s10, 4
    %s20 = sphi 0, %s22
    %s23 = sphi 0, %s20
    %s24 = sphi 0, %s23
    %s40 = sphi 0, %s24
    %s44 = sphi 0, %s44
    %s46 = sphi 0, %s44
    %s47 = sphi 0, %s46
    %s61 = sphi 0, %s47
    %s65 = sphi 0, %s65
    %s67 = sphi 0, %s65
    %s68 = sphi 0, %s67
    %s82 = sphi 0, %s68
    %s86 = sphi 0, %s86
    %s88 = sphi 0, %s86
    %s89 = sphi 0, %s88
    %s103 = sphi 0, %s89
    %s109 = sphi 0, %s111
    %s112 = sphi 0, %s109
    %s113 = sphi 0, %s112
    %s129 = sphi 0, %s113
  $region4: #{cafm_forward.2} parent=0 // loop_header_branch
    %13 = sbr.rel (%p11) target = $region8
  $region5: #{cafm_forward.2} parent=0 // loop_body
    %s15 = ssub.s32 %s10, 1
    %s16 = ssub.s32 %s10, 2
    %s17 = sadd.s32 %s10, 1
    %s18 = ssub.s32 %s10, %s17
    %p19 = scmp.eq.s32.totalorder %s18, 0
    %s21 = sadd.s32 %s20, 1
    %s22 = scalar_select %p19, %s20, %s21
    %p25 = pneg %p19
    %p26 = scmp.eq.s32.totalorder %s10, 1
    %p27 = por %p25, %p26
    %p28 = scmp.ne.s32.totalorder %s20, %s23
    %p29 = scmp.eq.s32.totalorder %s10, 0
    %p30 = por %p28, %p29
    %p31 = scmp.ne.s32.totalorder %s20, %s23
    %p32 = scmp.eq.s32.totalorder %s15, 1
    %p33 = por %p31, %p32
    %p34 = scmp.ne.s32.totalorder %s23, %s24
    %p35 = scmp.eq.s32.totalorder %s15, 0
    %p36 = por %p34, %p35
    %p37 = scmp.ne.s32.totalorder %s23, %s24
    %p38 = scmp.eq.s32.totalorder %s16, 1
    %p39 = por %p37, %p38
    %p41 = scmp.ne.s32.totalorder %s24, %s40
    %p42 = scmp.eq.s32.totalorder %s16, 0
    %p43 = por %p41, %p42
    %s45 = sadd.s32 %s44, 1
    %p48 = scmp.eq.s32.totalorder %s10, 1
    %p49 = scmp.ne.s32.totalorder %s44, %s46
    %p50 = scmp.eq.s32.totalorder %s10, 0
    %p51 = por %p49, %p50
    %p52 = scmp.ne.s32.totalorder %s44, %s46
    %p53 = scmp.eq.s32.totalorder %s15, 1
    %p54 = por %p52, %p53
    %p55 = scmp.ne.s32.totalorder %s46, %s47
    %p56 = scmp.eq.s32.totalorder %s15, 0
    %p57 = por %p55, %p56
    %p58 = scmp.ne.s32.totalorder %s46, %s47
    %p59 = scmp.eq.s32.totalorder %s16, 1
    %p60 = por %p58, %p59
    %p62 = scmp.ne.s32.totalorder %s47, %s61
    %p63 = scmp.eq.s32.totalorder %s16, 0
    %p64 = por %p62, %p63
    %s66 = sadd.s32 %s65, 1
    %p69 = scmp.eq.s32.totalorder %s10, 1
    %p70 = scmp.ne.s32.totalorder %s65, %s67
    %p71 = scmp.eq.s32.totalorder %s10, 0
    %p72 = por %p70, %p71
    %p73 = scmp.ne.s32.totalorder %s65, %s67
    %p74 = scmp.eq.s32.totalorder %s15, 1
    %p75 = por %p73, %p74
    %p76 = scmp.ne.s32.totalorder %s67, %s68
    %p77 = scmp.eq.s32.totalorder %s15, 0
    %p78 = por %p76, %p77
    %p79 = scmp.ne.s32.totalorder %s67, %s68
    %p80 = scmp.eq.s32.totalorder %s16, 1
    %p81 = por %p79, %p80
    %p83 = scmp.ne.s32.totalorder %s68, %s82
    %p84 = scmp.eq.s32.totalorder %s16, 0
    %p85 = por %p83, %p84
    %s87 = sadd.s32 %s86, 1
    %p90 = scmp.eq.s32.totalorder %s10, 1
    %p91 = scmp.ne.s32.totalorder %s86, %s88
    %p92 = scmp.eq.s32.totalorder %s10, 0
    %p93 = por %p91, %p92
    %p94 = scmp.ne.s32.totalorder %s86, %s88
    %p95 = scmp.eq.s32.totalorder %s15, 1
    %p96 = por %p94, %p95
    %p97 = scmp.ne.s32.totalorder %s88, %s89
    %p98 = scmp.eq.s32.totalorder %s15, 0
    %p99 = por %p97, %p98
    %p100 = scmp.ne.s32.totalorder %s88, %s89
    %p101 = scmp.eq.s32.totalorder %s16, 1
    %p102 = por %p100, %p101
    %p104 = scmp.ne.s32.totalorder %s89, %s103
    %p105 = scmp.eq.s32.totalorder %s16, 0
    %p106 = por %p104, %p105
    %s107 = ssub.s32 %s10, %s17
    %p108 = scmp.eq.s32.totalorder %s107, 0
    %s110 = sadd.s32 %s109, 1
    %s111 = scalar_select %p108, %s109, %s110
    %p114 = pneg %p108
    %p115 = scmp.eq.s32.totalorder %s10, 1
    %p116 = por %p114, %p115
    %p117 = scmp.ne.s32.totalorder %s109, %s112
    %p118 = scmp.eq.s32.totalorder %s10, 0
    %p119 = por %p117, %p118
    %p120 = scmp.ne.s32.totalorder %s109, %s112
    %p121 = scmp.eq.s32.totalorder %s15, 1
    %p122 = por %p120, %p121
    %p123 = scmp.ne.s32.totalorder %s112, %s113
    %p124 = scmp.eq.s32.totalorder %s15, 0
    %p125 = por %p123, %p124
    %p126 = scmp.ne.s32.totalorder %s112, %s113
    %p127 = scmp.eq.s32.totalorder %s16, 1
    %p128 = por %p126, %p127
    %p130 = scmp.ne.s32.totalorder %s113, %s129
    %p131 = scmp.eq.s32.totalorder %s16, 0
    %p132 = por %p130, %p131
    %p133 = scmp.le.s32.totalorder 1, %s10
    %p134 = scmp.lt.s32.totalorder %s10, 3
    %p135 = pnand %p133, %p134
    %p136 = pneg %p135
    // Predicated region
    $region9: #{cafm_forward.2} parent=5 // pred_check
      _
    $region10: #{cafm_forward.2} parent=5 // pred_check_branch
      %138 = sbr.rel (%p135) target = $region12
    $region11: #{cafm_forward.2} parent=5 // pred_region
      %s139 = ssub.s32 %s10, 1
      // Predicated region
      $region13: #{cafm_forward.2} parent=11 // pred_check
        %p140 = pneg %p57
      $region14: #{cafm_forward.2} parent=11 // pred_check_branch
        %142 = sbr.rel (%p140) target = $region16
      $region15: #{cafm_forward.2} parent=11 // pred_region
        _
      $region16: #{cafm_forward.2} parent=11 // pred_fallthru
        _
      // Predicated region
      $region17: #{cafm_forward.2} parent=11 // pred_check
        %p143 = pneg %p78
      $region18: #{cafm_forward.2} parent=11 // pred_check_branch
        %145 = sbr.rel (%p143) target = $region20
      $region19: #{cafm_forward.2} parent=11 // pred_region
        _
      $region20: #{cafm_forward.2} parent=11 // pred_fallthru
        _
      // Predicated region
      $region21: #{cafm_forward.2} parent=11 // pred_check
        %p146 = pneg %p99
      $region22: #{cafm_forward.2} parent=11 // pred_check_branch
        %148 = sbr.rel (%p146) target = $region24
      $region23: #{cafm_forward.2} parent=11 // pred_region
        _
      $region24: #{cafm_forward.2} parent=11 // pred_fallthru
        _
    $region12: #{cafm_forward.2} parent=5 // pred_fallthru
      _
    %p149 = scmp.lt.s32.totalorder %s10, 2
    // Predicated region
    $region25: #{cafm_forward.2} parent=5 // pred_check
      %p150 = pneg %p149
    $region26: #{cafm_forward.2} parent=5 // pred_check_branch
      %152 = sbr.rel (%p150) target = $region28
    $region27: #{cafm_forward.2} parent=5 // pred_region
      // Predicated region
      $region29: #{cafm_forward.2} parent=27 // pred_check
        %p153 = pneg %p30
      $region30: #{cafm_forward.2} parent=27 // pred_check_branch
        %155 = sbr.rel (%p153) target = $region32
      $region31: #{cafm_forward.2} parent=27 // pred_region
        %p156 = scmp.lt.s32.totalorder %s10, 1
        %s157 = scalar_select %p156, %s10, 1
        %s158 = smul.addr %s157, 4
        %s159 = smul.addr %s158, 8
        %s160 = scalar_lea.vmem %s0, %s159
      $region32: #{cafm_forward.2} parent=27 // pred_fallthru
        _
    $region28: #{cafm_forward.2} parent=5 // pred_fallthru
      _
    %p161 = scmp.le.s32.totalorder 1, %s10
    %p162 = scmp.lt.s32.totalorder %s10, 3
    %p163 = pnand %p161, %p162
    %p164 = pneg %p163
    // Predicated region
    $region33: #{cafm_forward.2} parent=5 // pred_check
      _
    $region34: #{cafm_forward.2} parent=5 // pred_check_branch
      %166 = sbr.rel (%p163) target = $region36
    $region35: #{cafm_forward.2} parent=5 // pred_region
      %s167 = ssub.s32 %s10, 1
      %p168 = scmp.lt.s32.totalorder %s15, 1
      %s169 = scalar_select %p168, %s15, 1
      %s170 = smul.addr %s169, 4
      %s171 = smul.addr %s170, 8
      %s172 = scalar_lea.vmem %s0, %s171
      %p173 = pneg %p36
      %p174 = pneg %p33
      %p175 = pneg %p57
      %p176 = pneg %p54
      %p177 = pneg %p78
      %p178 = pneg %p75
      %p179 = pneg %p99
      %p180 = pneg %p96
      %p181 = pneg %p125
      %p182 = pneg %p122
      %p183 = scmp.lt.s32.totalorder %s15, 1
      %s184 = scalar_select %p183, %s15, 1
      %s185 = smul.addr %s184, 12
      %s186 = smul.addr %s185, 4
      %s187 = scalar_lea.vmem %s4, %s186
      %p188 = scmp.lt.s32.totalorder %s15, 1
      %s189 = scalar_select %p188, %s15, 1
      %s190 = smul.addr %s189, 4
      %s191 = smul.addr %s190, 8
      %s192 = scalar_lea.vmem %s0, %s191
      %p193 = scmp.lt.s32.totalorder %s15, 1
      %s194 = scalar_select %p193, %s15, 1
      %s195 = smul.addr %s194, 12
      %s196 = smul.addr %s195, 4
      %s197 = scalar_lea.vmem %s4, %s196
      %v199 = vld [vmem:[%s1] sm:$0xf]
      %v200 = vld [vmem:[%s1 + $0x4] sm:$0xf]
      %v201 = vld [vmem:[%s1 + $0x8] sm:$0xf]
      %v202 = vld [vmem:[%s1 + $0xc] sm:$0xf]
      %v203 = vld [vmem:[%s1 + $0x10] sm:$0xf]
      %v204 = vld [vmem:[%s1 + $0x14] sm:$0xf]
      %v205 = vld [vmem:[%s192] sm:$0xff]
      %v206 = vld [vmem:[%s192 + $0x8] sm:$0xff]
      %v207 = vld [vmem:[%s192 + $0x10] sm:$0xff]
      %v208 = vld [vmem:[%s192 + $0x18] sm:$0xff]
      %v209 = vpack.c.bf16 %v207, %v205
      %v210 = vpack.c.bf16 %v208, %v206
      %v217 = vunpack.c.l.b16 %v199
      %v218 = vunpack.c.l.b16 %v200
      %v219 = vunpack.c.l.b16 %v201
      %v220 = vunpack.c.l.b16 %v202
      %v221 = vunpack.c.l.b16 %v203
      %v222 = vunpack.c.l.b16 %v204
      %v223 = vpack.c.b16 %v218, %v217
      %v224 = vpack.c.b16 %v220, %v219
      %v225 = vpack.c.b16 %v222, %v221
      %vm226 = vcmask 130048
      %v228 = vsel %vm226, %v223, 0
      %v231 = vsel %vm226, %v224, 0
      %v234 = vsel %vm226, %v225, 0
      %236 = vmatpush.bf16.msra.mxu0 0
      %237 = vmatpush.bf16.msra.mxu0 0
      %238 = vmatpush.bf16.msra.mxu0 0
      %239 = vmatpush.bf16.msra.mxu0 0
      %240 = vmatpush.bf16.msra.mxu0 0
      %241 = vmatpush.bf16.msra.mxu0 0
      %242 = vmatpush.bf16.msra.mxu0 0
      %243 = vmatpush.bf16.msra.mxu0 %v209
      %244 = vmatmul.bf16.gmra.mxu0 %v228
      %v245 = vpop.f32.mrf.mxu0
      %v246 = vadd.f32 0.0, %v245
      %v247 = vpop.f32.mrf.mxu0
      %v248 = vadd.f32 0.0, %v247
      %249 = vmatmul.bf16.gmra.mxu0 %v231
      %v250 = vpop.f32.mrf.mxu0
      %v251 = vadd.f32 0.0, %v250
      %v252 = vpop.f32.mrf.mxu0
      %v253 = vadd.f32 0.0, %v252
      %254 = vmatmul.bf16.gmra.mxu0 %v234
      %v255 = vpop.f32.mrf.mxu0
      %v256 = vadd.f32 0.0, %v255
      %v257 = vpop.f32.mrf.mxu0
      %v258 = vadd.f32 0.0, %v257
      %259 = vdwg.mxu0
      %260 = vmatpush.bf16.msra.mxu0 0
      %261 = vmatpush.bf16.msra.mxu0 0
      %262 = vmatpush.bf16.msra.mxu0 0
      %263 = vmatpush.bf16.msra.mxu0 0
      %264 = vmatpush.bf16.msra.mxu0 0
      %265 = vmatpush.bf16.msra.mxu0 0
      %266 = vmatpush.bf16.msra.mxu0 0
      %267 = vmatpush.bf16.msra.mxu0 %v210
      %268 = vmatmul.bf16.gmra.mxu0 %v228
      %v269 = vpop.f32.mrf.mxu0
      %v270 = vadd.f32 0.0, %v269
      %v271 = vpop.f32.mrf.mxu0
      %v272 = vadd.f32 0.0, %v271
      %273 = vmatmul.bf16.gmra.mxu0 %v231
      %v274 = vpop.f32.mrf.mxu0
      %v275 = vadd.f32 0.0, %v274
      %v276 = vpop.f32.mrf.mxu0
      %v277 = vadd.f32 0.0, %v276
      %278 = vmatmul.bf16.gmra.mxu0 %v234
      %v279 = vpop.f32.mrf.mxu0
      %v280 = vadd.f32 0.0, %v279
      %v281 = vpop.f32.mrf.mxu0
      %v282 = vadd.f32 0.0, %v281
      %283 = vdwg.mxu0
      %v284 = vld [vmem:[%s2] sm:$0xff]
      %v285 = vld [vmem:[%s2 + $0x8] sm:$0xff]
      %v286 = vld [vmem:[%s2 + $0x10] sm:$0xff]
      %v287 = vld [vmem:[%s2 + $0x18] sm:$0xff]
      %v288 = vld [vmem:[%s2 + $0x20] sm:$0xff]
      %v289 = vld [vmem:[%s2 + $0x28] sm:$0xff]
      %291 = vset.pattern.permute.xlu0 4
      %292 = vperm.xlu0 %291, %v284
      %v293 = vpop.permute.xlu0 %292
      %296 = vset.pattern.permute.xlu0 4
      %297 = vperm.xlu0 %296, %v285
      %v298 = vpop.permute.xlu0 %297
      %301 = vset.pattern.permute.xlu0 4
      %302 = vperm.xlu0 %301, %v286
      %v303 = vpop.permute.xlu0 %302
      %306 = vset.pattern.permute.xlu0 4
      %307 = vperm.xlu0 %306, %v287
      %v308 = vpop.permute.xlu0 %307
      %311 = vset.pattern.permute.xlu0 4
      %312 = vperm.xlu0 %311, %v288
      %v313 = vpop.permute.xlu0 %312
      %316 = vset.pattern.permute.xlu0 4
      %317 = vperm.xlu0 %316, %v289
      %v318 = vpop.permute.xlu0 %317
      %v320 = vmul.f32 %v246, %v293
      %v321 = vmul.f32 %v270, %v293
      %v322 = vmul.f32 %v248, %v298
      %v323 = vmul.f32 %v272, %v298
      %v324 = vmul.f32 %v251, %v303
      %v325 = vmul.f32 %v275, %v303
      %v326 = vmul.f32 %v253, %v308
      %v327 = vmul.f32 %v277, %v308
      %v328 = vmul.f32 %v256, %v313
      %v329 = vmul.f32 %v280, %v313
      %v330 = vmul.f32 %v258, %v318
      %v331 = vmul.f32 %v282, %v318
      %332 = vrot.lane.b32.xlu0 %v246, 17
      %v333 = vpop.permute.xlu0 %332
      %334 = vrot.lane.b32.xlu0 %v248, 17
      %v335 = vpop.permute.xlu0 %334
      %336 = vrot.lane.b32.xlu0 %v251, 17
      %v337 = vpop.permute.xlu0 %336
      %338 = vrot.lane.b32.xlu0 %v253, 17
      %v339 = vpop.permute.xlu0 %338
      %340 = vrot.lane.b32.xlu0 %v256, 17
      %v341 = vpop.permute.xlu0 %340
      %342 = vrot.lane.b32.xlu0 %v258, 17
      %v343 = vpop.permute.xlu0 %342
      %344 = vrot.lane.b32.xlu0 %v270, 17
      %v345 = vpop.permute.xlu0 %344
      %346 = vrot.lane.b32.xlu0 %v272, 17
      %v347 = vpop.permute.xlu0 %346
      %348 = vrot.lane.b32.xlu0 %v275, 17
      %v349 = vpop.permute.xlu0 %348
      %350 = vrot.lane.b32.xlu0 %v277, 17
      %v351 = vpop.permute.xlu0 %350
      %352 = vrot.lane.b32.xlu0 %v280, 17
      %v353 = vpop.permute.xlu0 %352
      %354 = vrot.lane.b32.xlu0 %v282, 17
      %v355 = vpop.permute.xlu0 %354
      %v356 = vlaneseq
      %v357 = vand.u32 %v356, 127
      %vm358 = vcmp.lt.s32.totalorder %v357, 17
      %v359 = vsel %vm358, %v333, %v345
      %v360 = vsel %vm358, %v335, %v347
      %v361 = vsel %vm358, %v337, %v349
      %v362 = vsel %vm358, %v339, %v351
      %v363 = vsel %vm358, %v341, %v353
      %v364 = vsel %vm358, %v343, %v355
      %v365 = vsel %vm358, %v345, %v333
      %v366 = vsel %vm358, %v347, %v335
      %v367 = vsel %vm358, %v349, %v337
      %v368 = vsel %vm358, %v351, %v339
      %v369 = vsel %vm358, %v353, %v341
      %v370 = vsel %vm358, %v355, %v343
      %v371 = vld [vmem:[%s3] ss:$8 sm:$0x3]
      %v373 = vperm.slane %v371, 0
      %v374 = vperm.slane %v371, 1
      %v377 = vmul.f32 %v365, %v373
      %v378 = vmul.f32 %v359, %v374
      %v379 = vmul.f32 %v366, %v373
      %v380 = vmul.f32 %v360, %v374
      %v381 = vmul.f32 %v367, %v373
      %v382 = vmul.f32 %v361, %v374
      %v383 = vmul.f32 %v368, %v373
      %v384 = vmul.f32 %v362, %v374
      %v385 = vmul.f32 %v369, %v373
      %v386 = vmul.f32 %v363, %v374
      %v387 = vmul.f32 %v370, %v373
      %v388 = vmul.f32 %v364, %v374
      %389 = vset.pattern.permute.xlu0 0
      %390 = vperm.xlu0 %389, %v284
      %v391 = vpop.permute.xlu0 %390
      %393 = vset.pattern.permute.xlu0 0
      %394 = vperm.xlu0 %393, %v285
      %v395 = vpop.permute.xlu0 %394
      %397 = vset.pattern.permute.xlu0 0
      %398 = vperm.xlu0 %397, %v286
      %v399 = vpop.permute.xlu0 %398
      %401 = vset.pattern.permute.xlu0 0
      %402 = vperm.xlu0 %401, %v287
      %v403 = vpop.permute.xlu0 %402
      %405 = vset.pattern.permute.xlu0 0
      %406 = vperm.xlu0 %405, %v288
      %v407 = vpop.permute.xlu0 %406
      %409 = vset.pattern.permute.xlu0 0
      %410 = vperm.xlu0 %409, %v289
      %v411 = vpop.permute.xlu0 %410
      %v413 = vmul.f32 %v377, %v391
      %v414 = vmul.f32 %v378, %v391
      %v415 = vmul.f32 %v379, %v395
      %v416 = vmul.f32 %v380, %v395
      %v417 = vmul.f32 %v381, %v399
      %v418 = vmul.f32 %v382, %v399
      %v419 = vmul.f32 %v383, %v403
      %v420 = vmul.f32 %v384, %v403
      %v421 = vmul.f32 %v385, %v407
      %v422 = vmul.f32 %v386, %v407
      %v423 = vmul.f32 %v387, %v411
      %v424 = vmul.f32 %v388, %v411
      %v425 = vadd.f32 %v320, %v413
      %v426 = vadd.f32 %v321, %v414
      %v427 = vadd.f32 %v322, %v415
      %v428 = vadd.f32 %v323, %v416
      %v429 = vadd.f32 %v324, %v417
      %v430 = vadd.f32 %v325, %v418
      %v431 = vadd.f32 %v326, %v419
      %v432 = vadd.f32 %v327, %v420
      %v433 = vadd.f32 %v328, %v421
      %v434 = vadd.f32 %v329, %v422
      %v435 = vadd.f32 %v330, %v423
      %v436 = vadd.f32 %v331, %v424
      %437 = vrot.lane.b32.xlu0 %v246, 16
      %v438 = vpop.permute.xlu0 %437
      %439 = vrot.lane.b32.xlu0 %v248, 16
      %v440 = vpop.permute.xlu0 %439
      %441 = vrot.lane.b32.xlu0 %v251, 16
      %v442 = vpop.permute.xlu0 %441
      %443 = vrot.lane.b32.xlu0 %v253, 16
      %v444 = vpop.permute.xlu0 %443
      %445 = vrot.lane.b32.xlu0 %v256, 16
      %v446 = vpop.permute.xlu0 %445
      %447 = vrot.lane.b32.xlu0 %v258, 16
      %v448 = vpop.permute.xlu0 %447
      %449 = vrot.lane.b32.xlu0 %v270, 16
      %v450 = vpop.permute.xlu0 %449
      %451 = vrot.lane.b32.xlu0 %v272, 16
      %v452 = vpop.permute.xlu0 %451
      %453 = vrot.lane.b32.xlu0 %v275, 16
      %v454 = vpop.permute.xlu0 %453
      %455 = vrot.lane.b32.xlu0 %v277, 16
      %v456 = vpop.permute.xlu0 %455
      %457 = vrot.lane.b32.xlu0 %v280, 16
      %v458 = vpop.permute.xlu0 %457
      %459 = vrot.lane.b32.xlu0 %v282, 16
      %v460 = vpop.permute.xlu0 %459
      %vm461 = vcmp.lt.s32.totalorder %v357, 16
      %v462 = vsel %vm461, %v438, %v450
      %v463 = vsel %vm461, %v440, %v452
      %v464 = vsel %vm461, %v442, %v454
      %v465 = vsel %vm461, %v444, %v456
      %v466 = vsel %vm461, %v446, %v458
      %v467 = vsel %vm461, %v448, %v460
      %v468 = vsel %vm461, %v450, %v438
      %v469 = vsel %vm461, %v452, %v440
      %v470 = vsel %vm461, %v454, %v442
      %v471 = vsel %vm461, %v456, %v444
      %v472 = vsel %vm461, %v458, %v446
      %v473 = vsel %vm461, %v460, %v448
      %s474 = scalar_lea.vmem %s3, 1
      %v475 = vld [vmem:[%s474] ss:$8 sm:$0x3]
      %v477 = vperm.slane %v475, 0
      %v478 = vperm.slane %v475, 1
      %v481 = vmul.f32 %v468, %v477
      %v482 = vmul.f32 %v462, %v478
      %v483 = vmul.f32 %v469, %v477
      %v484 = vmul.f32 %v463, %v478
      %v485 = vmul.f32 %v470, %v477
      %v486 = vmul.f32 %v464, %v478
      %v487 = vmul.f32 %v471, %v477
      %v488 = vmul.f32 %v465, %v478
      %v489 = vmul.f32 %v472, %v477
      %v490 = vmul.f32 %v466, %v478
      %v491 = vmul.f32 %v473, %v477
      %v492 = vmul.f32 %v467, %v478
      %493 = vset.pattern.permute.xlu0 1
      %494 = vperm.xlu0 %493, %v284
      %v495 = vpop.permute.xlu0 %494
      %497 = vset.pattern.permute.xlu0 1
      %498 = vperm.xlu0 %497, %v285
      %v499 = vpop.permute.xlu0 %498
      %501 = vset.pattern.permute.xlu0 1
      %502 = vperm.xlu0 %501, %v286
      %v503 = vpop.permute.xlu0 %502
      %505 = vset.pattern.permute.xlu0 1
      %506 = vperm.xlu0 %505, %v287
      %v507 = vpop.permute.xlu0 %506
      %509 = vset.pattern.permute.xlu0 1
      %510 = vperm.xlu0 %509, %v288
      %v511 = vpop.permute.xlu0 %510
      %513 = vset.pattern.permute.xlu0 1
      %514 = vperm.xlu0 %513, %v289
      %v515 = vpop.permute.xlu0 %514
      %v517 = vmul.f32 %v481, %v495
      %v518 = vmul.f32 %v482, %v495
      %v519 = vmul.f32 %v483, %v499
      %v520 = vmul.f32 %v484, %v499
      %v521 = vmul.f32 %v485, %v503
      %v522 = vmul.f32 %v486, %v503
      %v523 = vmul.f32 %v487, %v507
      %v524 = vmul.f32 %v488, %v507
      %v525 = vmul.f32 %v489, %v511
      %v526 = vmul.f32 %v490, %v511
      %v527 = vmul.f32 %v491, %v515
      %v528 = vmul.f32 %v492, %v515
      %v529 = vadd.f32 %v425, %v517
      %v530 = vadd.f32 %v426, %v518
      %v531 = vadd.f32 %v427, %v519
      %v532 = vadd.f32 %v428, %v520
      %v533 = vadd.f32 %v429, %v521
      %v534 = vadd.f32 %v430, %v522
      %v535 = vadd.f32 %v431, %v523
      %v536 = vadd.f32 %v432, %v524
      %v537 = vadd.f32 %v433, %v525
      %v538 = vadd.f32 %v434, %v526
      %v539 = vadd.f32 %v435, %v527
      %v540 = vadd.f32 %v436, %v528
      %541 = vrot.lane.b32.xlu0 %v246, 15
      %v542 = vpop.permute.xlu0 %541
      %543 = vrot.lane.b32.xlu0 %v248, 15
      %v544 = vpop.permute.xlu0 %543
      %545 = vrot.lane.b32.xlu0 %v251, 15
      %v546 = vpop.permute.xlu0 %545
      %547 = vrot.lane.b32.xlu0 %v253, 15
      %v548 = vpop.permute.xlu0 %547
      %549 = vrot.lane.b32.xlu0 %v256, 15
      %v550 = vpop.permute.xlu0 %549
      %551 = vrot.lane.b32.xlu0 %v258, 15
      %v552 = vpop.permute.xlu0 %551
      %553 = vrot.lane.b32.xlu0 %v270, 15
      %v554 = vpop.permute.xlu0 %553
      %555 = vrot.lane.b32.xlu0 %v272, 15
      %v556 = vpop.permute.xlu0 %555
      %557 = vrot.lane.b32.xlu0 %v275, 15
      %v558 = vpop.permute.xlu0 %557
      %559 = vrot.lane.b32.xlu0 %v277, 15
      %v560 = vpop.permute.xlu0 %559
      %561 = vrot.lane.b32.xlu0 %v280, 15
      %v562 = vpop.permute.xlu0 %561
      %563 = vrot.lane.b32.xlu0 %v282, 15
      %v564 = vpop.permute.xlu0 %563
      %vm565 = vcmp.lt.s32.totalorder %v357, 15
      %v566 = vsel %vm565, %v542, %v554
      %v567 = vsel %vm565, %v544, %v556
      %v568 = vsel %vm565, %v546, %v558
      %v569 = vsel %vm565, %v548, %v560
      %v570 = vsel %vm565, %v550, %v562
      %v571 = vsel %vm565, %v552, %v564
      %v572 = vsel %vm565, %v554, %v542
      %v573 = vsel %vm565, %v556, %v544
      %v574 = vsel %vm565, %v558, %v546
      %v575 = vsel %vm565, %v560, %v548
      %v576 = vsel %vm565, %v562, %v550
      %v577 = vsel %vm565, %v564, %v552
      %s578 = scalar_lea.vmem %s3, 2
      %v579 = vld [vmem:[%s578] ss:$8 sm:$0x3]
      %v581 = vperm.slane %v579, 0
      %v582 = vperm.slane %v579, 1
      %v585 = vmul.f32 %v572, %v581
      %v586 = vmul.f32 %v566, %v582
      %v587 = vmul.f32 %v573, %v581
      %v588 = vmul.f32 %v567, %v582
      %v589 = vmul.f32 %v574, %v581
      %v590 = vmul.f32 %v568, %v582
      %v591 = vmul.f32 %v575, %v581
      %v592 = vmul.f32 %v569, %v582
      %v593 = vmul.f32 %v576, %v581
      %v594 = vmul.f32 %v570, %v582
      %v595 = vmul.f32 %v577, %v581
      %v596 = vmul.f32 %v571, %v582
      %597 = vset.pattern.permute.xlu0 2
      %598 = vperm.xlu0 %597, %v284
      %v599 = vpop.permute.xlu0 %598
      %601 = vset.pattern.permute.xlu0 2
      %602 = vperm.xlu0 %601, %v285
      %v603 = vpop.permute.xlu0 %602
      %605 = vset.pattern.permute.xlu0 2
      %606 = vperm.xlu0 %605, %v286
      %v607 = vpop.permute.xlu0 %606
      %609 = vset.pattern.permute.xlu0 2
      %610 = vperm.xlu0 %609, %v287
      %v611 = vpop.permute.xlu0 %610
      %613 = vset.pattern.permute.xlu0 2
      %614 = vperm.xlu0 %613, %v288
      %v615 = vpop.permute.xlu0 %614
      %617 = vset.pattern.permute.xlu0 2
      %618 = vperm.xlu0 %617, %v289
      %v619 = vpop.permute.xlu0 %618
      %v621 = vmul.f32 %v585, %v599
      %v622 = vmul.f32 %v586, %v599
      %v623 = vmul.f32 %v587, %v603
      %v624 = vmul.f32 %v588, %v603
      %v625 = vmul.f32 %v589, %v607
      %v626 = vmul.f32 %v590, %v607
      %v627 = vmul.f32 %v591, %v611
      %v628 = vmul.f32 %v592, %v611
      %v629 = vmul.f32 %v593, %v615
      %v630 = vmul.f32 %v594, %v615
      %v631 = vmul.f32 %v595, %v619
      %v632 = vmul.f32 %v596, %v619
      %v633 = vadd.f32 %v529, %v621
      %v634 = vadd.f32 %v530, %v622
      %v635 = vadd.f32 %v531, %v623
      %v636 = vadd.f32 %v532, %v624
      %v637 = vadd.f32 %v533, %v625
      %v638 = vadd.f32 %v534, %v626
      %v639 = vadd.f32 %v535, %v627
      %v640 = vadd.f32 %v536, %v628
      %v641 = vadd.f32 %v537, %v629
      %v642 = vadd.f32 %v538, %v630
      %v643 = vadd.f32 %v539, %v631
      %v644 = vadd.f32 %v540, %v632
      %645 = vrot.lane.b32.xlu0 %v246, 1
      %v646 = vpop.permute.xlu0 %645
      %647 = vrot.lane.b32.xlu0 %v248, 1
      %v648 = vpop.permute.xlu0 %647
      %649 = vrot.lane.b32.xlu0 %v251, 1
      %v650 = vpop.permute.xlu0 %649
      %651 = vrot.lane.b32.xlu0 %v253, 1
      %v652 = vpop.permute.xlu0 %651
      %653 = vrot.lane.b32.xlu0 %v256, 1
      %v654 = vpop.permute.xlu0 %653
      %655 = vrot.lane.b32.xlu0 %v258, 1
      %v656 = vpop.permute.xlu0 %655
      %657 = vrot.lane.b32.xlu0 %v270, 1
      %v658 = vpop.permute.xlu0 %657
      %659 = vrot.lane.b32.xlu0 %v272, 1
      %v660 = vpop.permute.xlu0 %659
      %661 = vrot.lane.b32.xlu0 %v275, 1
      %v662 = vpop.permute.xlu0 %661
      %663 = vrot.lane.b32.xlu0 %v277, 1
      %v664 = vpop.permute.xlu0 %663
      %665 = vrot.lane.b32.xlu0 %v280, 1
      %v666 = vpop.permute.xlu0 %665
      %667 = vrot.lane.b32.xlu0 %v282, 1
      %v668 = vpop.permute.xlu0 %667
      %vm669 = vcmp.lt.s32.totalorder %v357, 1
      %v670 = vsel %vm669, %v646, %v658
      %v671 = vsel %vm669, %v648, %v660
      %v672 = vsel %vm669, %v650, %v662
      %v673 = vsel %vm669, %v652, %v664
      %v674 = vsel %vm669, %v654, %v666
      %v675 = vsel %vm669, %v656, %v668
      %v676 = vsel %vm669, %v658, %v646
      %v677 = vsel %vm669, %v660, %v648
      %v678 = vsel %vm669, %v662, %v650
      %v679 = vsel %vm669, %v664, %v652
      %v680 = vsel %vm669, %v666, %v654
      %v681 = vsel %vm669, %v668, %v656
      %s682 = scalar_lea.vmem %s3, 3
      %v683 = vld [vmem:[%s682] ss:$8 sm:$0x3]
      %v685 = vperm.slane %v683, 0
      %v686 = vperm.slane %v683, 1
      %v689 = vmul.f32 %v676, %v685
      %v690 = vmul.f32 %v670, %v686
      %v691 = vmul.f32 %v677, %v685
      %v692 = vmul.f32 %v671, %v686
      %v693 = vmul.f32 %v678, %v685
      %v694 = vmul.f32 %v672, %v686
      %v695 = vmul.f32 %v679, %v685
      %v696 = vmul.f32 %v673, %v686
      %v697 = vmul.f32 %v680, %v685
      %v698 = vmul.f32 %v674, %v686
      %v699 = vmul.f32 %v681, %v685
      %v700 = vmul.f32 %v675, %v686
      %701 = vset.pattern.permute.xlu0 3
      %702 = vperm.xlu0 %701, %v284
      %v703 = vpop.permute.xlu0 %702
      %705 = vset.pattern.permute.xlu0 3
      %706 = vperm.xlu0 %705, %v285
      %v707 = vpop.permute.xlu0 %706
      %709 = vset.pattern.permute.xlu0 3
      %710 = vperm.xlu0 %709, %v286
      %v711 = vpop.permute.xlu0 %710
      %713 = vset.pattern.permute.xlu0 3
      %714 = vperm.xlu0 %713, %v287
      %v715 = vpop.permute.xlu0 %714
      %717 = vset.pattern.permute.xlu0 3
      %718 = vperm.xlu0 %717, %v288
      %v719 = vpop.permute.xlu0 %718
      %721 = vset.pattern.permute.xlu0 3
      %722 = vperm.xlu0 %721, %v289
      %v723 = vpop.permute.xlu0 %722
      %v725 = vmul.f32 %v689, %v703
      %v726 = vmul.f32 %v690, %v703
      %v727 = vmul.f32 %v691, %v707
      %v728 = vmul.f32 %v692, %v707
      %v729 = vmul.f32 %v693, %v711
      %v730 = vmul.f32 %v694, %v711
      %v731 = vmul.f32 %v695, %v715
      %v732 = vmul.f32 %v696, %v715
      %v733 = vmul.f32 %v697, %v719
      %v734 = vmul.f32 %v698, %v719
      %v735 = vmul.f32 %v699, %v723
      %v736 = vmul.f32 %v700, %v723
      %v737 = vadd.f32 %v633, %v725
      %v738 = vadd.f32 %v634, %v726
      %v739 = vadd.f32 %v635, %v727
      %v740 = vadd.f32 %v636, %v728
      %v741 = vadd.f32 %v637, %v729
      %v742 = vadd.f32 %v638, %v730
      %v743 = vadd.f32 %v639, %v731
      %v744 = vadd.f32 %v640, %v732
      %v745 = vadd.f32 %v641, %v733
      %v746 = vadd.f32 %v642, %v734
      %v747 = vadd.f32 %v643, %v735
      %v748 = vadd.f32 %v644, %v736
      %749 = vrot.lane.b32.xlu0 %v246, 127
      %v750 = vpop.permute.xlu0 %749
      %751 = vrot.lane.b32.xlu0 %v248, 127
      %v752 = vpop.permute.xlu0 %751
      %753 = vrot.lane.b32.xlu0 %v251, 127
      %v754 = vpop.permute.xlu0 %753
      %755 = vrot.lane.b32.xlu0 %v253, 127
      %v756 = vpop.permute.xlu0 %755
      %757 = vrot.lane.b32.xlu0 %v256, 127
      %v758 = vpop.permute.xlu0 %757
      %759 = vrot.lane.b32.xlu0 %v258, 127
      %v760 = vpop.permute.xlu0 %759
      %761 = vrot.lane.b32.xlu0 %v270, 127
      %v762 = vpop.permute.xlu0 %761
      %763 = vrot.lane.b32.xlu0 %v272, 127
      %v764 = vpop.permute.xlu0 %763
      %765 = vrot.lane.b32.xlu0 %v275, 127
      %v766 = vpop.permute.xlu0 %765
      %767 = vrot.lane.b32.xlu0 %v277, 127
      %v768 = vpop.permute.xlu0 %767
      %769 = vrot.lane.b32.xlu0 %v280, 127
      %v770 = vpop.permute.xlu0 %769
      %771 = vrot.lane.b32.xlu0 %v282, 127
      %v772 = vpop.permute.xlu0 %771
      %vm773 = vcmp.lt.s32.totalorder %v357, 127
      %v774 = vsel %vm773, %v750, %v762
      %v775 = vsel %vm773, %v752, %v764
      %v776 = vsel %vm773, %v754, %v766
      %v777 = vsel %vm773, %v756, %v768
      %v778 = vsel %vm773, %v758, %v770
      %v779 = vsel %vm773, %v760, %v772
      %v780 = vsel %vm773, %v762, %v750
      %v781 = vsel %vm773, %v764, %v752
      %v782 = vsel %vm773, %v766, %v754
      %v783 = vsel %vm773, %v768, %v756
      %v784 = vsel %vm773, %v770, %v758
      %v785 = vsel %vm773, %v772, %v760
      %s786 = scalar_lea.vmem %s3, 5
      %v787 = vld [vmem:[%s786] ss:$8 sm:$0x3]
      %v789 = vperm.slane %v787, 0
      %v790 = vperm.slane %v787, 1
      %v793 = vmul.f32 %v774, %v789
      %v794 = vmul.f32 %v780, %v790
      %v795 = vmul.f32 %v775, %v789
      %v796 = vmul.f32 %v781, %v790
      %v797 = vmul.f32 %v776, %v789
      %v798 = vmul.f32 %v782, %v790
      %v799 = vmul.f32 %v777, %v789
      %v800 = vmul.f32 %v783, %v790
      %v801 = vmul.f32 %v778, %v789
      %v802 = vmul.f32 %v784, %v790
      %v803 = vmul.f32 %v779, %v789
      %v804 = vmul.f32 %v785, %v790
      %805 = vset.pattern.permute.xlu0 5
      %806 = vperm.xlu0 %805, %v284
      %v807 = vpop.permute.xlu0 %806
      %809 = vset.pattern.permute.xlu0 5
      %810 = vperm.xlu0 %809, %v285
      %v811 = vpop.permute.xlu0 %810
      %813 = vset.pattern.permute.xlu0 5
      %814 = vperm.xlu0 %813, %v286
      %v815 = vpop.permute.xlu0 %814
      %817 = vset.pattern.permute.xlu0 5
      %818 = vperm.xlu0 %817, %v287
      %v819 = vpop.permute.xlu0 %818
      %821 = vset.pattern.permute.xlu0 5
      %822 = vperm.xlu0 %821, %v288
      %v823 = vpop.permute.xlu0 %822
      %825 = vset.pattern.permute.xlu0 5
      %826 = vperm.xlu0 %825, %v289
      %v827 = vpop.permute.xlu0 %826
      %v829 = vmul.f32 %v793, %v807
      %v830 = vmul.f32 %v794, %v807
      %v831 = vmul.f32 %v795, %v811
      %v832 = vmul.f32 %v796, %v811
      %v833 = vmul.f32 %v797, %v815
      %v834 = vmul.f32 %v798, %v815
      %v835 = vmul.f32 %v799, %v819
      %v836 = vmul.f32 %v800, %v819
      %v837 = vmul.f32 %v801, %v823
      %v838 = vmul.f32 %v802, %v823
      %v839 = vmul.f32 %v803, %v827
      %v840 = vmul.f32 %v804, %v827
      %v841 = vadd.f32 %v737, %v829
      %v842 = vadd.f32 %v738, %v830
      %v843 = vadd.f32 %v739, %v831
      %v844 = vadd.f32 %v740, %v832
      %v845 = vadd.f32 %v741, %v833
      %v846 = vadd.f32 %v742, %v834
      %v847 = vadd.f32 %v743, %v835
      %v848 = vadd.f32 %v744, %v836
      %v849 = vadd.f32 %v745, %v837
      %v850 = vadd.f32 %v746, %v838
      %v851 = vadd.f32 %v747, %v839
      %v852 = vadd.f32 %v748, %v840
      %853 = vrot.lane.b32.xlu0 %v246, 113
      %v854 = vpop.permute.xlu0 %853
      %855 = vrot.lane.b32.xlu0 %v248, 113
      %v856 = vpop.permute.xlu0 %855
      %857 = vrot.lane.b32.xlu0 %v251, 113
      %v858 = vpop.permute.xlu0 %857
      %859 = vrot.lane.b32.xlu0 %v253, 113
      %v860 = vpop.permute.xlu0 %859
      %861 = vrot.lane.b32.xlu0 %v256, 113
      %v862 = vpop.permute.xlu0 %861
      %863 = vrot.lane.b32.xlu0 %v258, 113
      %v864 = vpop.permute.xlu0 %863
      %865 = vrot.lane.b32.xlu0 %v270, 113
      %v866 = vpop.permute.xlu0 %865
      %867 = vrot.lane.b32.xlu0 %v272, 113
      %v868 = vpop.permute.xlu0 %867
      %869 = vrot.lane.b32.xlu0 %v275, 113
      %v870 = vpop.permute.xlu0 %869
      %871 = vrot.lane.b32.xlu0 %v277, 113
      %v872 = vpop.permute.xlu0 %871
      %873 = vrot.lane.b32.xlu0 %v280, 113
      %v874 = vpop.permute.xlu0 %873
      %875 = vrot.lane.b32.xlu0 %v282, 113
      %v876 = vpop.permute.xlu0 %875
      %vm877 = vcmp.lt.s32.totalorder %v357, 113
      %v878 = vsel %vm877, %v854, %v866
      %v879 = vsel %vm877, %v856, %v868
      %v880 = vsel %vm877, %v858, %v870
      %v881 = vsel %vm877, %v860, %v872
      %v882 = vsel %vm877, %v862, %v874
      %v883 = vsel %vm877, %v864, %v876
      %v884 = vsel %vm877, %v866, %v854
      %v885 = vsel %vm877, %v868, %v856
      %v886 = vsel %vm877, %v870, %v858
      %v887 = vsel %vm877, %v872, %v860
      %v888 = vsel %vm877, %v874, %v862
      %v889 = vsel %vm877, %v876, %v864
      %s890 = scalar_lea.vmem %s3, 6
      %v891 = vld [vmem:[%s890] ss:$8 sm:$0x3]
      %v893 = vperm.slane %v891, 0
      %v894 = vperm.slane %v891, 1
      %v897 = vmul.f32 %v878, %v893
      %v898 = vmul.f32 %v884, %v894
      %v899 = vmul.f32 %v879, %v893
      %v900 = vmul.f32 %v885, %v894
      %v901 = vmul.f32 %v880, %v893
      %v902 = vmul.f32 %v886, %v894
      %v903 = vmul.f32 %v881, %v893
      %v904 = vmul.f32 %v887, %v894
      %v905 = vmul.f32 %v882, %v893
      %v906 = vmul.f32 %v888, %v894
      %v907 = vmul.f32 %v883, %v893
      %v908 = vmul.f32 %v889, %v894
      %909 = vset.pattern.permute.xlu0 6
      %910 = vperm.xlu0 %909, %v284
      %v911 = vpop.permute.xlu0 %910
      %913 = vset.pattern.permute.xlu0 6
      %914 = vperm.xlu0 %913, %v285
      %v915 = vpop.permute.xlu0 %914
      %917 = vset.pattern.permute.xlu0 6
      %918 = vperm.xlu0 %917, %v286
      %v919 = vpop.permute.xlu0 %918
      %921 = vset.pattern.permute.xlu0 6
      %922 = vperm.xlu0 %921, %v287
      %v923 = vpop.permute.xlu0 %922
      %925 = vset.pattern.permute.xlu0 6
      %926 = vperm.xlu0 %925, %v288
      %v927 = vpop.permute.xlu0 %926
      %929 = vset.pattern.permute.xlu0 6
      %930 = vperm.xlu0 %929, %v289
      %v931 = vpop.permute.xlu0 %930
      %v933 = vmul.f32 %v897, %v911
      %v934 = vmul.f32 %v898, %v911
      %v935 = vmul.f32 %v899, %v915
      %v936 = vmul.f32 %v900, %v915
      %v937 = vmul.f32 %v901, %v919
      %v938 = vmul.f32 %v902, %v919
      %v939 = vmul.f32 %v903, %v923
      %v940 = vmul.f32 %v904, %v923
      %v941 = vmul.f32 %v905, %v927
      %v942 = vmul.f32 %v906, %v927
      %v943 = vmul.f32 %v907, %v931
      %v944 = vmul.f32 %v908, %v931
      %v945 = vadd.f32 %v841, %v933
      %v946 = vadd.f32 %v842, %v934
      %v947 = vadd.f32 %v843, %v935
      %v948 = vadd.f32 %v844, %v936
      %v949 = vadd.f32 %v845, %v937
      %v950 = vadd.f32 %v846, %v938
      %v951 = vadd.f32 %v847, %v939
      %v952 = vadd.f32 %v848, %v940
      %v953 = vadd.f32 %v849, %v941
      %v954 = vadd.f32 %v850, %v942
      %v955 = vadd.f32 %v851, %v943
      %v956 = vadd.f32 %v852, %v944
      %957 = vrot.lane.b32.xlu0 %v246, 112
      %v958 = vpop.permute.xlu0 %957
      %959 = vrot.lane.b32.xlu0 %v248, 112
      %v960 = vpop.permute.xlu0 %959
      %961 = vrot.lane.b32.xlu0 %v251, 112
      %v962 = vpop.permute.xlu0 %961
      %963 = vrot.lane.b32.xlu0 %v253, 112
      %v964 = vpop.permute.xlu0 %963
      %965 = vrot.lane.b32.xlu0 %v256, 112
      %v966 = vpop.permute.xlu0 %965
      %967 = vrot.lane.b32.xlu0 %v258, 112
      %v968 = vpop.permute.xlu0 %967
      %969 = vrot.lane.b32.xlu0 %v270, 112
      %v970 = vpop.permute.xlu0 %969
      %971 = vrot.lane.b32.xlu0 %v272, 112
      %v972 = vpop.permute.xlu0 %971
      %973 = vrot.lane.b32.xlu0 %v275, 112
      %v974 = vpop.permute.xlu0 %973
      %975 = vrot.lane.b32.xlu0 %v277, 112
      %v976 = vpop.permute.xlu0 %975
      %977 = vrot.lane.b32.xlu0 %v280, 112
      %v978 = vpop.permute.xlu0 %977
      %979 = vrot.lane.b32.xlu0 %v282, 112
      %v980 = vpop.permute.xlu0 %979
      %vm981 = vcmp.lt.s32.totalorder %v357, 112
      %v982 = vsel %vm981, %v958, %v970
      %v983 = vsel %vm981, %v960, %v972
      %v984 = vsel %vm981, %v962, %v974
      %v985 = vsel %vm981, %v964, %v976
      %v986 = vsel %vm981, %v966, %v978
      %v987 = vsel %vm981, %v968, %v980
      %v988 = vsel %vm981, %v970, %v958
      %v989 = vsel %vm981, %v972, %v960
      %v990 = vsel %vm981, %v974, %v962
      %v991 = vsel %vm981, %v976, %v964
      %v992 = vsel %vm981, %v978, %v966
      %v993 = vsel %vm981, %v980, %v968
      %s994 = scalar_lea.vmem %s3, 7
      %v995 = vld [vmem:[%s994] ss:$8 sm:$0x3]
      %v997 = vperm.slane %v995, 0
      %v998 = vperm.slane %v995, 1
      %v1001 = vmul.f32 %v982, %v997
      %v1002 = vmul.f32 %v988, %v998
      %v1003 = vmul.f32 %v983, %v997
      %v1004 = vmul.f32 %v989, %v998
      %v1005 = vmul.f32 %v984, %v997
      %v1006 = vmul.f32 %v990, %v998
      %v1007 = vmul.f32 %v985, %v997
      %v1008 = vmul.f32 %v991, %v998
      %v1009 = vmul.f32 %v986, %v997
      %v1010 = vmul.f32 %v992, %v998
      %v1011 = vmul.f32 %v987, %v997
      %v1012 = vmul.f32 %v993, %v998
      %1013 = vset.pattern.permute.xlu0 7
      %1014 = vperm.xlu0 %1013, %v284
      %v1015 = vpop.permute.xlu0 %1014
      %1017 = vset.pattern.permute.xlu0 7
      %1018 = vperm.xlu0 %1017, %v285
      %v1019 = vpop.permute.xlu0 %1018
      %1021 = vset.pattern.permute.xlu0 7
      %1022 = vperm.xlu0 %1021, %v286
      %v1023 = vpop.permute.xlu0 %1022
      %1025 = vset.pattern.permute.xlu0 7
      %1026 = vperm.xlu0 %1025, %v287
      %v1027 = vpop.permute.xlu0 %1026
      %1029 = vset.pattern.permute.xlu0 7
      %1030 = vperm.xlu0 %1029, %v288
      %v1031 = vpop.permute.xlu0 %1030
      %1033 = vset.pattern.permute.xlu0 7
      %1034 = vperm.xlu0 %1033, %v289
      %v1035 = vpop.permute.xlu0 %1034
      %v1037 = vmul.f32 %v1001, %v1015
      %v1038 = vmul.f32 %v1002, %v1015
      %v1039 = vmul.f32 %v1003, %v1019
      %v1040 = vmul.f32 %v1004, %v1019
      %v1041 = vmul.f32 %v1005, %v1023
      %v1042 = vmul.f32 %v1006, %v1023
      %v1043 = vmul.f32 %v1007, %v1027
      %v1044 = vmul.f32 %v1008, %v1027
      %v1045 = vmul.f32 %v1009, %v1031
      %v1046 = vmul.f32 %v1010, %v1031
      %v1047 = vmul.f32 %v1011, %v1035
      %v1048 = vmul.f32 %v1012, %v1035
      %v1049 = vadd.f32 %v945, %v1037
      %v1050 = vadd.f32 %v946, %v1038
      %v1051 = vadd.f32 %v947, %v1039
      %v1052 = vadd.f32 %v948, %v1040
      %v1053 = vadd.f32 %v949, %v1041
      %v1054 = vadd.f32 %v950, %v1042
      %v1055 = vadd.f32 %v951, %v1043
      %v1056 = vadd.f32 %v952, %v1044
      %v1057 = vadd.f32 %v953, %v1045
      %v1058 = vadd.f32 %v954, %v1046
      %v1059 = vadd.f32 %v955, %v1047
      %v1060 = vadd.f32 %v956, %v1048
      %1061 = vrot.lane.b32.xlu0 %v246, 111
      %v1062 = vpop.permute.xlu0 %1061
      %1063 = vrot.lane.b32.xlu0 %v248, 111
      %v1064 = vpop.permute.xlu0 %1063
      %1065 = vrot.lane.b32.xlu0 %v251, 111
      %v1066 = vpop.permute.xlu0 %1065
      %1067 = vrot.lane.b32.xlu0 %v253, 111
      %v1068 = vpop.permute.xlu0 %1067
      %1069 = vrot.lane.b32.xlu0 %v256, 111
      %v1070 = vpop.permute.xlu0 %1069
      %1071 = vrot.lane.b32.xlu0 %v258, 111
      %v1072 = vpop.permute.xlu0 %1071
      %1073 = vrot.lane.b32.xlu0 %v270, 111
      %v1074 = vpop.permute.xlu0 %1073
      %1075 = vrot.lane.b32.xlu0 %v272, 111
      %v1076 = vpop.permute.xlu0 %1075
      %1077 = vrot.lane.b32.xlu0 %v275, 111
      %v1078 = vpop.permute.xlu0 %1077
      %1079 = vrot.lane.b32.xlu0 %v277, 111
      %v1080 = vpop.permute.xlu0 %1079
      %1081 = vrot.lane.b32.xlu0 %v280, 111
      %v1082 = vpop.permute.xlu0 %1081
      %1083 = vrot.lane.b32.xlu0 %v282, 111
      %v1084 = vpop.permute.xlu0 %1083
      %vm1085 = vcmp.lt.s32.totalorder %v357, 111
      %v1086 = vsel %vm1085, %v1062, %v1074
      %v1087 = vsel %vm1085, %v1064, %v1076
      %v1088 = vsel %vm1085, %v1066, %v1078
      %v1089 = vsel %vm1085, %v1068, %v1080
      %v1090 = vsel %vm1085, %v1070, %v1082
      %v1091 = vsel %vm1085, %v1072, %v1084
      %v1092 = vsel %vm1085, %v1074, %v1062
      %v1093 = vsel %vm1085, %v1076, %v1064
      %v1094 = vsel %vm1085, %v1078, %v1066
      %v1095 = vsel %vm1085, %v1080, %v1068
      %v1096 = vsel %vm1085, %v1082, %v1070
      %v1097 = vsel %vm1085, %v1084, %v1072
      %s1098 = scalar_lea.vmem %s3, 16
      %v1099 = vld [vmem:[%s1098] ss:$8 sm:$0x3]
      %v1101 = vperm.slane %v1099, 0
      %v1102 = vperm.slane %v1099, 1
      %v1105 = vmul.f32 %v1086, %v1101
      %v1106 = vmul.f32 %v1092, %v1102
      %v1107 = vmul.f32 %v1087, %v1101
      %v1108 = vmul.f32 %v1093, %v1102
      %v1109 = vmul.f32 %v1088, %v1101
      %v1110 = vmul.f32 %v1094, %v1102
      %v1111 = vmul.f32 %v1089, %v1101
      %v1112 = vmul.f32 %v1095, %v1102
      %v1113 = vmul.f32 %v1090, %v1101
      %v1114 = vmul.f32 %v1096, %v1102
      %v1115 = vmul.f32 %v1091, %v1101
      %v1116 = vmul.f32 %v1097, %v1102
      %1117 = vset.pattern.permute.xlu0 8
      %1118 = vperm.xlu0 %1117, %v284
      %v1119 = vpop.permute.xlu0 %1118
      %1121 = vset.pattern.permute.xlu0 8
      %1122 = vperm.xlu0 %1121, %v285
      %v1123 = vpop.permute.xlu0 %1122
      %1125 = vset.pattern.permute.xlu0 8
      %1126 = vperm.xlu0 %1125, %v286
      %v1127 = vpop.permute.xlu0 %1126
      %1129 = vset.pattern.permute.xlu0 8
      %1130 = vperm.xlu0 %1129, %v287
      %v1131 = vpop.permute.xlu0 %1130
      %1133 = vset.pattern.permute.xlu0 8
      %1134 = vperm.xlu0 %1133, %v288
      %v1135 = vpop.permute.xlu0 %1134
      %1137 = vset.pattern.permute.xlu0 8
      %1138 = vperm.xlu0 %1137, %v289
      %v1139 = vpop.permute.xlu0 %1138
      %v1141 = vmul.f32 %v1105, %v1119
      %v1142 = vmul.f32 %v1106, %v1119
      %v1143 = vmul.f32 %v1107, %v1123
      %v1144 = vmul.f32 %v1108, %v1123
      %v1145 = vmul.f32 %v1109, %v1127
      %v1146 = vmul.f32 %v1110, %v1127
      %v1147 = vmul.f32 %v1111, %v1131
      %v1148 = vmul.f32 %v1112, %v1131
      %v1149 = vmul.f32 %v1113, %v1135
      %v1150 = vmul.f32 %v1114, %v1135
      %v1151 = vmul.f32 %v1115, %v1139
      %v1152 = vmul.f32 %v1116, %v1139
      %v1153 = vadd.f32 %v1049, %v1141
      %v1154 = vadd.f32 %v1050, %v1142
      %v1155 = vadd.f32 %v1051, %v1143
      %v1156 = vadd.f32 %v1052, %v1144
      %v1157 = vadd.f32 %v1053, %v1145
      %v1158 = vadd.f32 %v1054, %v1146
      %v1159 = vadd.f32 %v1055, %v1147
      %v1160 = vadd.f32 %v1056, %v1148
      %v1161 = vadd.f32 %v1057, %v1149
      %v1162 = vadd.f32 %v1058, %v1150
      %v1163 = vadd.f32 %v1059, %v1151
      %v1164 = vadd.f32 %v1060, %v1152
      %v1165 = vpack.c.bf16 %v1154, %v1153
      %v1166 = vpack.c.bf16 %v1156, %v1155
      %v1167 = vpack.c.bf16 %v1158, %v1157
      %v1168 = vpack.c.bf16 %v1160, %v1159
      %v1169 = vpack.c.bf16 %v1162, %v1161
      %v1170 = vpack.c.bf16 %v1164, %v1163
      %1171 = vst [vmem:[%s197] sm:$0xff] %v1165
      %1172 = vst [vmem:[%s197 + $0x8] sm:$0xff] %v1166
      %1173 = vst [vmem:[%s197 + $0x10] sm:$0xff] %v1167
      %1174 = vst [vmem:[%s197 + $0x18] sm:$0xff] %v1168
      %1175 = vst [vmem:[%s197 + $0x20] sm:$0xff] %v1169
      %1176 = vst [vmem:[%s197 + $0x28] sm:$0xff] %v1170
      %p1177 = scmp.lt.s32.totalorder %s15, 1
      %s1178 = scalar_select %p1177, %s15, 1
      %s1179 = smul.addr %s1178, 12
      %s1180 = smul.addr %s1179, 4
      %s1181 = scalar_lea.vmem %s4, %s1180
      // Predicated region
      $region37: #{cafm_forward.2} parent=35 // pred_check
        %p1182 = pneg %p122
      $region38: #{cafm_forward.2} parent=35 // pred_check_branch
        %1184 = sbr.rel (%p1182) target = $region40
      $region39: #{cafm_forward.2} parent=35 // pred_region
        _
      $region40: #{cafm_forward.2} parent=35 // pred_fallthru
        _
    $region36: #{cafm_forward.2} parent=5 // pred_fallthru
      _
    %p1185 = scmp.le.s32.totalorder 2, %s10
    // Predicated region
    $region41: #{cafm_forward.2} parent=5 // pred_check
      %p1186 = pneg %p1185
    $region42: #{cafm_forward.2} parent=5 // pred_check_branch
      %1188 = sbr.rel (%p1186) target = $region44
    $region43: #{cafm_forward.2} parent=5 // pred_region
      %s1189 = ssub.s32 %s10, 2
      // Predicated region
      $region45: #{cafm_forward.2} parent=43 // pred_check
        %p1190 = pneg %p128
      $region46: #{cafm_forward.2} parent=43 // pred_check_branch
        %1192 = sbr.rel (%p1190) target = $region48
      $region47: #{cafm_forward.2} parent=43 // pred_region
        %p1193 = scmp.lt.s32.totalorder %s16, 1
        %s1194 = scalar_select %p1193, %s16, 1
        %s1195 = smul.addr %s1194, 12
        %s1196 = smul.addr %s1195, 4
        %s1197 = scalar_lea.vmem %s4, %s1196
      $region48: #{cafm_forward.2} parent=43 // pred_fallthru
        _
    $region44: #{cafm_forward.2} parent=5 // pred_fallthru
      _
  $region6: #{cafm_forward.2} parent=0 // loop_footer
    %s14 = sadd.s32 1, %s10
  $region7: #{cafm_forward.2} parent=0 // loop_footer_branch
    %9 = sbr.rel target = $region3
  $region8: #{cafm_forward.2} parent=0 // loop_exit
    _

// kernel: cafm_forward.3
$region0: #{cafm_forward.3}
  #allocation0 [shape = 'u32[]', space=smem, size = 0x4, offset = 0x4, fixed_abs, tag = 'smem constant byte address 0x4 - core index']
  #allocation1 [shape = 'u32[72,128]{1,0:T(1,128)}', space=vmem, size = 0x9000, scoped, tag = 'internal scratch']
  %s0 = inlined_call_operand.vmem [shape: bf16[2,48,256], index: 0, kind: input, shape index: {}]
  %s1 = inlined_call_operand.vmem [shape: bf16[2,256,48], index: 1, kind: input, shape index: {}]
  %s2 = inlined_call_operand.vmem [shape: bf16[36,48], index: 2, kind: input, shape index: {}]
  %s3 = inlined_call_operand.vmem [shape: f32[36,1], index: 3, kind: input, shape index: {}]
  %s4 = inlined_call_operand.vmem [shape: bf16[144,36], index: 4, kind: input, shape index: {}]
  %s5 = inlined_call_operand.vmem [shape: f32[16,1], index: 5, kind: input, shape index: {}]
  %s6 = inlined_call_operand.vmem [shape: bf16[16,16], index: 6, kind: input, shape index: {}]
  %s7 = inlined_call_operand.vmem [shape: f32[16,1], index: 7, kind: input, shape index: {}]
  %s8 = inlined_call_operand.vmem [shape: f32[16,16], index: 8, kind: input, shape index: {}]
  %s9 = inlined_call_operand.vmem [shape: f32[9,256], index: 9, kind: input, shape index: {}]
  %s10 = inlined_call_operand.vmem [shape: f32[2,16,256], index: 10, kind: output, shape index: {}]
  %s11 = sld [smem:[#allocation0]]
  $region73: #{cafm_forward.3} parent=0
    _
  %s13 = ssub.s32 1, %s11
  %s14 = scalar_select 0, %s13, %s11
  loop: start=0, step=1, limit=4
  $region2: #{cafm_forward.3} parent=0 // loop_pre_header
    _
  $region3: #{cafm_forward.3} parent=0 // loop_header
    %s16 = sphi 0, %s20
    %p17 = scmp.ge.s32.totalorder %s16, 4
    %s26 = sphi 0, %s28
    %s29 = sphi 0, %s26
    %s30 = sphi 0, %s29
    %s46 = sphi 0, %s30
    %s52 = sphi 0, %s54
    %s55 = sphi 0, %s52
    %s56 = sphi 0, %s55
    %s72 = sphi 0, %s56
    %s76 = sphi 0, %s76
    %s78 = sphi 0, %s76
    %s79 = sphi 0, %s78
    %s93 = sphi 0, %s79
    %s97 = sphi 0, %s97
    %s99 = sphi 0, %s97
    %s100 = sphi 0, %s99
    %s114 = sphi 0, %s100
    %s118 = sphi 0, %s118
    %s120 = sphi 0, %s118
    %s121 = sphi 0, %s120
    %s135 = sphi 0, %s121
    %s139 = sphi 0, %s139
    %s141 = sphi 0, %s139
    %s142 = sphi 0, %s141
    %s156 = sphi 0, %s142
    %s160 = sphi 0, %s160
    %s162 = sphi 0, %s160
    %s163 = sphi 0, %s162
    %s177 = sphi 0, %s163
    %s181 = sphi 0, %s181
    %s183 = sphi 0, %s181
    %s184 = sphi 0, %s183
    %s198 = sphi 0, %s184
    %s202 = sphi 0, %s202
    %s204 = sphi 0, %s202
    %s205 = sphi 0, %s204
    %s219 = sphi 0, %s205
    %s223 = sphi 0, %s223
    %s225 = sphi 0, %s223
    %s226 = sphi 0, %s225
    %s240 = sphi 0, %s226
    %s246 = sphi 0, %s248
    %s249 = sphi 0, %s246
    %s250 = sphi 0, %s249
    %s266 = sphi 0, %s250
  $region4: #{cafm_forward.3} parent=0 // loop_header_branch
    %19 = sbr.rel (%p17) target = $region8
  $region5: #{cafm_forward.3} parent=0 // loop_body
    %s21 = ssub.s32 %s16, 1
    %s22 = ssub.s32 %s16, 2
    %s23 = sadd.s32 %s16, 1
    %s24 = ssub.s32 %s16, %s23
    %p25 = scmp.eq.s32.totalorder %s24, 0
    %s27 = sadd.s32 %s26, 1
    %s28 = scalar_select %p25, %s26, %s27
    %p31 = pneg %p25
    %p32 = scmp.eq.s32.totalorder %s16, 1
    %p33 = por %p31, %p32
    %p34 = scmp.ne.s32.totalorder %s26, %s29
    %p35 = scmp.eq.s32.totalorder %s16, 0
    %p36 = por %p34, %p35
    %p37 = scmp.ne.s32.totalorder %s26, %s29
    %p38 = scmp.eq.s32.totalorder %s21, 1
    %p39 = por %p37, %p38
    %p40 = scmp.ne.s32.totalorder %s29, %s30
    %p41 = scmp.eq.s32.totalorder %s21, 0
    %p42 = por %p40, %p41
    %p43 = scmp.ne.s32.totalorder %s29, %s30
    %p44 = scmp.eq.s32.totalorder %s22, 1
    %p45 = por %p43, %p44
    %p47 = scmp.ne.s32.totalorder %s30, %s46
    %p48 = scmp.eq.s32.totalorder %s22, 0
    %p49 = por %p47, %p48
    %s50 = ssub.s32 %s16, %s23
    %p51 = scmp.eq.s32.totalorder %s50, 0
    %s53 = sadd.s32 %s52, 1
    %s54 = scalar_select %p51, %s52, %s53
    %p57 = pneg %p51
    %p58 = scmp.eq.s32.totalorder %s16, 1
    %p59 = por %p57, %p58
    %p60 = scmp.ne.s32.totalorder %s52, %s55
    %p61 = scmp.eq.s32.totalorder %s16, 0
    %p62 = por %p60, %p61
    %p63 = scmp.ne.s32.totalorder %s52, %s55
    %p64 = scmp.eq.s32.totalorder %s21, 1
    %p65 = por %p63, %p64
    %p66 = scmp.ne.s32.totalorder %s55, %s56
    %p67 = scmp.eq.s32.totalorder %s21, 0
    %p68 = por %p66, %p67
    %p69 = scmp.ne.s32.totalorder %s55, %s56
    %p70 = scmp.eq.s32.totalorder %s22, 1
    %p71 = por %p69, %p70
    %p73 = scmp.ne.s32.totalorder %s56, %s72
    %p74 = scmp.eq.s32.totalorder %s22, 0
    %p75 = por %p73, %p74
    %s77 = sadd.s32 %s76, 1
    %p80 = scmp.eq.s32.totalorder %s16, 1
    %p81 = scmp.ne.s32.totalorder %s76, %s78
    %p82 = scmp.eq.s32.totalorder %s16, 0
    %p83 = por %p81, %p82
    %p84 = scmp.ne.s32.totalorder %s76, %s78
    %p85 = scmp.eq.s32.totalorder %s21, 1
    %p86 = por %p84, %p85
    %p87 = scmp.ne.s32.totalorder %s78, %s79
    %p88 = scmp.eq.s32.totalorder %s21, 0
    %p89 = por %p87, %p88
    %p90 = scmp.ne.s32.totalorder %s78, %s79
    %p91 = scmp.eq.s32.totalorder %s22, 1
    %p92 = por %p90, %p91
    %p94 = scmp.ne.s32.totalorder %s79, %s93
    %p95 = scmp.eq.s32.totalorder %s22, 0
    %p96 = por %p94, %p95
    %s98 = sadd.s32 %s97, 1
    %p101 = scmp.eq.s32.totalorder %s16, 1
    %p102 = scmp.ne.s32.totalorder %s97, %s99
    %p103 = scmp.eq.s32.totalorder %s16, 0
    %p104 = por %p102, %p103
    %p105 = scmp.ne.s32.totalorder %s97, %s99
    %p106 = scmp.eq.s32.totalorder %s21, 1
    %p107 = por %p105, %p106
    %p108 = scmp.ne.s32.totalorder %s99, %s100
    %p109 = scmp.eq.s32.totalorder %s21, 0
    %p110 = por %p108, %p109
    %p111 = scmp.ne.s32.totalorder %s99, %s100
    %p112 = scmp.eq.s32.totalorder %s22, 1
    %p113 = por %p111, %p112
    %p115 = scmp.ne.s32.totalorder %s100, %s114
    %p116 = scmp.eq.s32.totalorder %s22, 0
    %p117 = por %p115, %p116
    %s119 = sadd.s32 %s118, 1
    %p122 = scmp.eq.s32.totalorder %s16, 1
    %p123 = scmp.ne.s32.totalorder %s118, %s120
    %p124 = scmp.eq.s32.totalorder %s16, 0
    %p125 = por %p123, %p124
    %p126 = scmp.ne.s32.totalorder %s118, %s120
    %p127 = scmp.eq.s32.totalorder %s21, 1
    %p128 = por %p126, %p127
    %p129 = scmp.ne.s32.totalorder %s120, %s121
    %p130 = scmp.eq.s32.totalorder %s21, 0
    %p131 = por %p129, %p130
    %p132 = scmp.ne.s32.totalorder %s120, %s121
    %p133 = scmp.eq.s32.totalorder %s22, 1
    %p134 = por %p132, %p133
    %p136 = scmp.ne.s32.totalorder %s121, %s135
    %p137 = scmp.eq.s32.totalorder %s22, 0
    %p138 = por %p136, %p137
    %s140 = sadd.s32 %s139, 1
    %p143 = scmp.eq.s32.totalorder %s16, 1
    %p144 = scmp.ne.s32.totalorder %s139, %s141
    %p145 = scmp.eq.s32.totalorder %s16, 0
    %p146 = por %p144, %p145
    %p147 = scmp.ne.s32.totalorder %s139, %s141
    %p148 = scmp.eq.s32.totalorder %s21, 1
    %p149 = por %p147, %p148
    %p150 = scmp.ne.s32.totalorder %s141, %s142
    %p151 = scmp.eq.s32.totalorder %s21, 0
    %p152 = por %p150, %p151
    %p153 = scmp.ne.s32.totalorder %s141, %s142
    %p154 = scmp.eq.s32.totalorder %s22, 1
    %p155 = por %p153, %p154
    %p157 = scmp.ne.s32.totalorder %s142, %s156
    %p158 = scmp.eq.s32.totalorder %s22, 0
    %p159 = por %p157, %p158
    %s161 = sadd.s32 %s160, 1
    %p164 = scmp.eq.s32.totalorder %s16, 1
    %p165 = scmp.ne.s32.totalorder %s160, %s162
    %p166 = scmp.eq.s32.totalorder %s16, 0
    %p167 = por %p165, %p166
    %p168 = scmp.ne.s32.totalorder %s160, %s162
    %p169 = scmp.eq.s32.totalorder %s21, 1
    %p170 = por %p168, %p169
    %p171 = scmp.ne.s32.totalorder %s162, %s163
    %p172 = scmp.eq.s32.totalorder %s21, 0
    %p173 = por %p171, %p172
    %p174 = scmp.ne.s32.totalorder %s162, %s163
    %p175 = scmp.eq.s32.totalorder %s22, 1
    %p176 = por %p174, %p175
    %p178 = scmp.ne.s32.totalorder %s163, %s177
    %p179 = scmp.eq.s32.totalorder %s22, 0
    %p180 = por %p178, %p179
    %s182 = sadd.s32 %s181, 1
    %p185 = scmp.eq.s32.totalorder %s16, 1
    %p186 = scmp.ne.s32.totalorder %s181, %s183
    %p187 = scmp.eq.s32.totalorder %s16, 0
    %p188 = por %p186, %p187
    %p189 = scmp.ne.s32.totalorder %s181, %s183
    %p190 = scmp.eq.s32.totalorder %s21, 1
    %p191 = por %p189, %p190
    %p192 = scmp.ne.s32.totalorder %s183, %s184
    %p193 = scmp.eq.s32.totalorder %s21, 0
    %p194 = por %p192, %p193
    %p195 = scmp.ne.s32.totalorder %s183, %s184
    %p196 = scmp.eq.s32.totalorder %s22, 1
    %p197 = por %p195, %p196
    %p199 = scmp.ne.s32.totalorder %s184, %s198
    %p200 = scmp.eq.s32.totalorder %s22, 0
    %p201 = por %p199, %p200
    %s203 = sadd.s32 %s202, 1
    %p206 = scmp.eq.s32.totalorder %s16, 1
    %p207 = scmp.ne.s32.totalorder %s202, %s204
    %p208 = scmp.eq.s32.totalorder %s16, 0
    %p209 = por %p207, %p208
    %p210 = scmp.ne.s32.totalorder %s202, %s204
    %p211 = scmp.eq.s32.totalorder %s21, 1
    %p212 = por %p210, %p211
    %p213 = scmp.ne.s32.totalorder %s204, %s205
    %p214 = scmp.eq.s32.totalorder %s21, 0
    %p215 = por %p213, %p214
    %p216 = scmp.ne.s32.totalorder %s204, %s205
    %p217 = scmp.eq.s32.totalorder %s22, 1
    %p218 = por %p216, %p217
    %p220 = scmp.ne.s32.totalorder %s205, %s219
    %p221 = scmp.eq.s32.totalorder %s22, 0
    %p222 = por %p220, %p221
    %s224 = sadd.s32 %s223, 1
    %p227 = scmp.eq.s32.totalorder %s16, 1
    %p228 = scmp.ne.s32.totalorder %s223, %s225
    %p229 = scmp.eq.s32.totalorder %s16, 0
    %p230 = por %p228, %p229
    %p231 = scmp.ne.s32.totalorder %s223, %s225
    %p232 = scmp.eq.s32.totalorder %s21, 1
    %p233 = por %p231, %p232
    %p234 = scmp.ne.s32.totalorder %s225, %s226
    %p235 = scmp.eq.s32.totalorder %s21, 0
    %p236 = por %p234, %p235
    %p237 = scmp.ne.s32.totalorder %s225, %s226
    %p238 = scmp.eq.s32.totalorder %s22, 1
    %p239 = por %p237, %p238
    %p241 = scmp.ne.s32.totalorder %s226, %s240
    %p242 = scmp.eq.s32.totalorder %s22, 0
    %p243 = por %p241, %p242
    %s244 = ssub.s32 %s16, %s23
    %p245 = scmp.eq.s32.totalorder %s244, 0
    %s247 = sadd.s32 %s246, 1
    %s248 = scalar_select %p245, %s246, %s247
    %p251 = pneg %p245
    %p252 = scmp.eq.s32.totalorder %s16, 1
    %p253 = por %p251, %p252
    %p254 = scmp.ne.s32.totalorder %s246, %s249
    %p255 = scmp.eq.s32.totalorder %s16, 0
    %p256 = por %p254, %p255
    %p257 = scmp.ne.s32.totalorder %s246, %s249
    %p258 = scmp.eq.s32.totalorder %s21, 1
    %p259 = por %p257, %p258
    %p260 = scmp.ne.s32.totalorder %s249, %s250
    %p261 = scmp.eq.s32.totalorder %s21, 0
    %p262 = por %p260, %p261
    %p263 = scmp.ne.s32.totalorder %s249, %s250
    %p264 = scmp.eq.s32.totalorder %s22, 1
    %p265 = por %p263, %p264
    %p267 = scmp.ne.s32.totalorder %s250, %s266
    %p268 = scmp.eq.s32.totalorder %s22, 0
    %p269 = por %p267, %p268
    %p270 = scmp.le.s32.totalorder 1, %s16
    %p271 = scmp.lt.s32.totalorder %s16, 3
    %p272 = pnand %p270, %p271
    %p273 = pneg %p272
    // Predicated region
    $region9: #{cafm_forward.3} parent=5 // pred_check
      _
    $region10: #{cafm_forward.3} parent=5 // pred_check_branch
      %275 = sbr.rel (%p272) target = $region12
    $region11: #{cafm_forward.3} parent=5 // pred_region
      %s276 = ssub.s32 %s16, 1
      // Predicated region
      $region13: #{cafm_forward.3} parent=11 // pred_check
        %p277 = pneg %p89
      $region14: #{cafm_forward.3} parent=11 // pred_check_branch
        %279 = sbr.rel (%p277) target = $region16
      $region15: #{cafm_forward.3} parent=11 // pred_region
        _
      $region16: #{cafm_forward.3} parent=11 // pred_fallthru
        _
      // Predicated region
      $region17: #{cafm_forward.3} parent=11 // pred_check
        %p280 = pneg %p110
      $region18: #{cafm_forward.3} parent=11 // pred_check_branch
        %282 = sbr.rel (%p280) target = $region20
      $region19: #{cafm_forward.3} parent=11 // pred_region
        _
      $region20: #{cafm_forward.3} parent=11 // pred_fallthru
        _
      // Predicated region
      $region21: #{cafm_forward.3} parent=11 // pred_check
        %p283 = pneg %p131
      $region22: #{cafm_forward.3} parent=11 // pred_check_branch
        %285 = sbr.rel (%p283) target = $region24
      $region23: #{cafm_forward.3} parent=11 // pred_region
        _
      $region24: #{cafm_forward.3} parent=11 // pred_fallthru
        _
      // Predicated region
      $region25: #{cafm_forward.3} parent=11 // pred_check
        %p286 = pneg %p152
      $region26: #{cafm_forward.3} parent=11 // pred_check_branch
        %288 = sbr.rel (%p286) target = $region28
      $region27: #{cafm_forward.3} parent=11 // pred_region
        _
      $region28: #{cafm_forward.3} parent=11 // pred_fallthru
        _
      // Predicated region
      $region29: #{cafm_forward.3} parent=11 // pred_check
        %p289 = pneg %p173
      $region30: #{cafm_forward.3} parent=11 // pred_check_branch
        %291 = sbr.rel (%p289) target = $region32
      $region31: #{cafm_forward.3} parent=11 // pred_region
        _
      $region32: #{cafm_forward.3} parent=11 // pred_fallthru
        _
      // Predicated region
      $region33: #{cafm_forward.3} parent=11 // pred_check
        %p292 = pneg %p194
      $region34: #{cafm_forward.3} parent=11 // pred_check_branch
        %294 = sbr.rel (%p292) target = $region36
      $region35: #{cafm_forward.3} parent=11 // pred_region
        _
      $region36: #{cafm_forward.3} parent=11 // pred_fallthru
        _
      // Predicated region
      $region37: #{cafm_forward.3} parent=11 // pred_check
        %p295 = pneg %p215
      $region38: #{cafm_forward.3} parent=11 // pred_check_branch
        %297 = sbr.rel (%p295) target = $region40
      $region39: #{cafm_forward.3} parent=11 // pred_region
        _
      $region40: #{cafm_forward.3} parent=11 // pred_fallthru
        _
      // Predicated region
      $region41: #{cafm_forward.3} parent=11 // pred_check
        %p298 = pneg %p236
      $region42: #{cafm_forward.3} parent=11 // pred_check_branch
        %300 = sbr.rel (%p298) target = $region44
      $region43: #{cafm_forward.3} parent=11 // pred_region
        _
      $region44: #{cafm_forward.3} parent=11 // pred_fallthru
        _
    $region12: #{cafm_forward.3} parent=5 // pred_fallthru
      _
    %p301 = scmp.lt.s32.totalorder %s16, 2
    // Predicated region
    $region45: #{cafm_forward.3} parent=5 // pred_check
      %p302 = pneg %p301
    $region46: #{cafm_forward.3} parent=5 // pred_check_branch
      %304 = sbr.rel (%p302) target = $region48
    $region47: #{cafm_forward.3} parent=5 // pred_region
      // Predicated region
      $region49: #{cafm_forward.3} parent=47 // pred_check
        %p305 = pneg %p36
      $region50: #{cafm_forward.3} parent=47 // pred_check_branch
        %307 = sbr.rel (%p305) target = $region52
      $region51: #{cafm_forward.3} parent=47 // pred_region
        %p308 = scmp.lt.s32.totalorder %s16, 1
        %s309 = scalar_select %p308, %s16, 1
        %s310 = smul.addr %s309, 12
        %s311 = smul.addr %s310, 4
        %s312 = scalar_lea.vmem %s0, %s311
      $region52: #{cafm_forward.3} parent=47 // pred_fallthru
        _
      // Predicated region
      $region53: #{cafm_forward.3} parent=47 // pred_check
        %p313 = pneg %p62
      $region54: #{cafm_forward.3} parent=47 // pred_check_branch
        %315 = sbr.rel (%p313) target = $region56
      $region55: #{cafm_forward.3} parent=47 // pred_region
        %p316 = scmp.lt.s32.totalorder %s16, 1
        %s317 = scalar_select %p316, %s16, 1
        %s318 = smul.addr %s317, 32
        %s319 = smul.addr %s318, 4
        %s320 = scalar_lea.vmem %s1, %s319
      $region56: #{cafm_forward.3} parent=47 // pred_fallthru
        _
    $region48: #{cafm_forward.3} parent=5 // pred_fallthru
      _
    %p321 = scmp.le.s32.totalorder 1, %s16
    %p322 = scmp.lt.s32.totalorder %s16, 3
    %p323 = pnand %p321, %p322
    %p324 = pneg %p323
    // Predicated region
    $region57: #{cafm_forward.3} parent=5 // pred_check
      _
    $region58: #{cafm_forward.3} parent=5 // pred_check_branch
      %326 = sbr.rel (%p323) target = $region60
    $region59: #{cafm_forward.3} parent=5 // pred_region
      %s327 = ssub.s32 %s16, 1
      %p328 = scmp.lt.s32.totalorder %s21, 1
      %s329 = scalar_select %p328, %s21, 1
      %s330 = smul.addr %s329, 12
      %s331 = smul.addr %s330, 4
      %s332 = scalar_lea.vmem %s0, %s331
      %p333 = pneg %p42
      %p334 = pneg %p39
      %p335 = scmp.lt.s32.totalorder %s21, 1
      %s336 = scalar_select %p335, %s21, 1
      %s337 = smul.addr %s336, 32
      %s338 = smul.addr %s337, 4
      %s339 = scalar_lea.vmem %s1, %s338
      %p340 = pneg %p68
      %p341 = pneg %p65
      %p342 = pneg %p89
      %p343 = pneg %p86
      %p344 = pneg %p110
      %p345 = pneg %p107
      %p346 = pneg %p131
      %p347 = pneg %p128
      %p348 = pneg %p152
      %p349 = pneg %p149
      %p350 = pneg %p173
      %p351 = pneg %p170
      %p352 = pneg %p194
      %p353 = pneg %p191
      %p354 = pneg %p215
      %p355 = pneg %p212
      %p356 = pneg %p236
      %p357 = pneg %p233
      %p358 = pneg %p262
      %p359 = pneg %p259
      %p360 = scmp.lt.s32.totalorder %s21, 1
      %s361 = scalar_select %p360, %s21, 1
      %s362 = smul.addr %s361, 4
      %s363 = smul.addr %s362, 8
      %s364 = scalar_lea.vmem %s10, %s363
      %p365 = scmp.lt.s32.totalorder %s21, 1
      %s366 = scalar_select %p365, %s21, 1
      %s367 = smul.addr %s366, 12
      %s368 = smul.addr %s367, 4
      %s369 = scalar_lea.vmem %s0, %s368
      %p370 = scmp.lt.s32.totalorder %s21, 1
      %s371 = scalar_select %p370, %s21, 1
      %s372 = smul.addr %s371, 32
      %s373 = smul.addr %s372, 4
      %s374 = scalar_lea.vmem %s1, %s373
      %p375 = scmp.lt.s32.totalorder %s21, 1
      %s376 = scalar_select %p375, %s21, 1
      %s377 = smul.addr %s376, 4
      %s378 = smul.addr %s377, 8
      %s379 = scalar_lea.vmem %s10, %s378
      %v381 = vld [vmem:[%s2] sm:$0xf]
      %v382 = vld [vmem:[%s2 + $0x4] sm:$0xf]
      %v383 = vld [vmem:[%s2 + $0x8] sm:$0xf]
      %v384 = vld [vmem:[%s2 + $0xc] sm:$0xf]
      %v385 = vld [vmem:[%s2 + $0x10] sm:$0x3]
      %v386 = vld [vmem:[%s374] sm:$0xf]
      %v387 = vld [vmem:[%s374 + $0x4] sm:$0xf]
      %v388 = vld [vmem:[%s374 + $0x8] sm:$0xf]
      %v389 = vld [vmem:[%s374 + $0xc] sm:$0xf]
      %v390 = vld [vmem:[%s374 + $0x10] sm:$0xf]
      %v391 = vld [vmem:[%s374 + $0x14] sm:$0xf]
      %v392 = vld [vmem:[%s374 + $0x18] sm:$0xf]
      %v393 = vld [vmem:[%s374 + $0x1c] sm:$0xf]
      %v394 = vld [vmem:[%s374 + $0x20] sm:$0xf]
      %v395 = vld [vmem:[%s374 + $0x24] sm:$0xf]
      %v396 = vld [vmem:[%s374 + $0x28] sm:$0xf]
      %v397 = vld [vmem:[%s374 + $0x2c] sm:$0xf]
      %v398 = vld [vmem:[%s374 + $0x30] sm:$0xf]
      %v399 = vld [vmem:[%s374 + $0x34] sm:$0xf]
      %v400 = vld [vmem:[%s374 + $0x38] sm:$0xf]
      %v401 = vld [vmem:[%s374 + $0x3c] sm:$0xf]
      %v402 = vld [vmem:[%s374 + $0x40] sm:$0xf]
      %v403 = vld [vmem:[%s374 + $0x44] sm:$0xf]
      %v404 = vld [vmem:[%s374 + $0x48] sm:$0xf]
      %v405 = vld [vmem:[%s374 + $0x4c] sm:$0xf]
      %v406 = vld [vmem:[%s374 + $0x50] sm:$0xf]
      %v407 = vld [vmem:[%s374 + $0x54] sm:$0xf]
      %v408 = vld [vmem:[%s374 + $0x58] sm:$0xf]
      %v409 = vld [vmem:[%s374 + $0x5c] sm:$0xf]
      %v410 = vld [vmem:[%s374 + $0x60] sm:$0xf]
      %v411 = vld [vmem:[%s374 + $0x64] sm:$0xf]
      %v412 = vld [vmem:[%s374 + $0x68] sm:$0xf]
      %v413 = vld [vmem:[%s374 + $0x6c] sm:$0xf]
      %v414 = vld [vmem:[%s374 + $0x70] sm:$0xf]
      %v415 = vld [vmem:[%s374 + $0x74] sm:$0xf]
      %v416 = vld [vmem:[%s374 + $0x78] sm:$0xf]
      %v417 = vld [vmem:[%s374 + $0x7c] sm:$0xf]
      %v418 = vld [vmem:[%s3] sm:$0xff]
      %v419 = vld [vmem:[%s3 + $0x8] sm:$0xff]
      %v420 = vld [vmem:[%s3 + $0x10] sm:$0xff]
      %v421 = vld [vmem:[%s3 + $0x18] sm:$0xff]
      %v422 = vld [vmem:[%s3 + $0x20] sm:$0xf]
      %424 = vset.pattern.permute.xlu0 0
      %425 = vperm.xlu0 %424, %v418
      %v426 = vpop.permute.xlu0 %425
      %429 = vset.pattern.permute.xlu0 0
      %430 = vperm.xlu0 %429, %v419
      %v431 = vpop.permute.xlu0 %430
      %434 = vset.pattern.permute.xlu0 0
      %435 = vperm.xlu0 %434, %v420
      %v436 = vpop.permute.xlu0 %435
      %439 = vset.pattern.permute.xlu0 0
      %440 = vperm.xlu0 %439, %v421
      %v441 = vpop.permute.xlu0 %440
      %444 = vset.pattern.permute.xlu0 0
      %445 = vperm.xlu0 %444, %v422
      %v446 = vpop.permute.xlu0 %445
      %v453 = vunpack.c.l.b16 %v381
      %v454 = vunpack.c.l.b16 %v382
      %v455 = vunpack.c.l.b16 %v383
      %v456 = vunpack.c.l.b16 %v384
      %v457 = vunpack.c.l.b16 %v385
      %v458 = vpack.c.b16 %v454, %v453
      %v459 = vpack.c.b16 %v456, %v455
      %v460 = vpack.c.b16 %v457, %v457
      %v493 = vunpack.c.l.b16 %v386
      %v494 = vunpack.c.l.b16 %v387
      %v495 = vunpack.c.l.b16 %v388
      %v496 = vunpack.c.l.b16 %v389
      %v497 = vunpack.c.l.b16 %v390
      %v498 = vunpack.c.l.b16 %v391
      %v499 = vunpack.c.l.b16 %v392
      %v500 = vunpack.c.l.b16 %v393
      %v501 = vunpack.c.l.b16 %v394
      %v502 = vunpack.c.l.b16 %v395
      %v503 = vunpack.c.l.b16 %v396
      %v504 = vunpack.c.l.b16 %v397
      %v505 = vunpack.c.l.b16 %v398
      %v506 = vunpack.c.l.b16 %v399
      %v507 = vunpack.c.l.b16 %v400
      %v508 = vunpack.c.l.b16 %v401
      %v509 = vunpack.c.l.b16 %v402
      %v510 = vunpack.c.l.b16 %v403
      %v511 = vunpack.c.l.b16 %v404
      %v512 = vunpack.c.l.b16 %v405
      %v513 = vunpack.c.l.b16 %v406
      %v514 = vunpack.c.l.b16 %v407
      %v515 = vunpack.c.l.b16 %v408
      %v516 = vunpack.c.l.b16 %v409
      %v517 = vunpack.c.l.b16 %v410
      %v518 = vunpack.c.l.b16 %v411
      %v519 = vunpack.c.l.b16 %v412
      %v520 = vunpack.c.l.b16 %v413
      %v521 = vunpack.c.l.b16 %v414
      %v522 = vunpack.c.l.b16 %v415
      %v523 = vunpack.c.l.b16 %v416
      %v524 = vunpack.c.l.b16 %v417
      %v525 = vpack.c.b16 %v494, %v493
      %v526 = vpack.c.b16 %v496, %v495
      %v527 = vpack.c.b16 %v498, %v497
      %v528 = vpack.c.b16 %v500, %v499
      %v529 = vpack.c.b16 %v502, %v501
      %v530 = vpack.c.b16 %v504, %v503
      %v531 = vpack.c.b16 %v506, %v505
      %v532 = vpack.c.b16 %v508, %v507
      %v533 = vpack.c.b16 %v510, %v509
      %v534 = vpack.c.b16 %v512, %v511
      %v535 = vpack.c.b16 %v514, %v513
      %v536 = vpack.c.b16 %v516, %v515
      %v537 = vpack.c.b16 %v518, %v517
      %v538 = vpack.c.b16 %v520, %v519
      %v539 = vpack.c.b16 %v522, %v521
      %v540 = vpack.c.b16 %v524, %v523
      %vm541 = vcmask 392192
      %v543 = vsel %vm541, %v458, 0
      %v546 = vsel %vm541, %v459, 0
      %v549 = vsel %vm541, %v460, 0
      %v552 = vsel %vm541, %v525, 0
      %v555 = vsel %vm541, %v526, 0
      %v558 = vsel %vm541, %v527, 0
      %v561 = vsel %vm541, %v528, 0
      %v564 = vsel %vm541, %v529, 0
      %v567 = vsel %vm541, %v530, 0
      %v570 = vsel %vm541, %v531, 0
      %v573 = vsel %vm541, %v532, 0
      %v576 = vsel %vm541, %v533, 0
      %v579 = vsel %vm541, %v534, 0
      %v582 = vsel %vm541, %v535, 0
      %v585 = vsel %vm541, %v536, 0
      %v588 = vsel %vm541, %v537, 0
      %v591 = vsel %vm541, %v538, 0
      %v594 = vsel %vm541, %v539, 0
      %v597 = vsel %vm541, %v540, 0
      %599 = vmatpush.bf16.xpose.msra.mxu0 %v573
      %600 = vmatpush.bf16.xpose.msra.mxu0 %v570
      %601 = vmatpush.bf16.xpose.msra.mxu0 %v567
      %602 = vmatpush.bf16.xpose.msra.mxu0 %v564
      %603 = vmatpush.bf16.xpose.msra.mxu0 %v561
      %604 = vmatpush.bf16.xpose.msra.mxu0 %v558
      %605 = vmatpush.bf16.xpose.msra.mxu0 %v555
      %606 = vmatpush.bf16.xpose.msra.mxu0 %v552
      %607 = vmatmul.bf16.gmra.mxu0 %v543
      %v608 = vpop.f32.mrf.mxu0
      %v609 = vadd.f32 %v426, %v608
      %v610 = vpop.f32.mrf.mxu0
      %v611 = vadd.f32 %v431, %v610
      %612 = vmatmul.bf16.gmra.mxu0 %v546
      %v613 = vpop.f32.mrf.mxu0
      %v614 = vadd.f32 %v436, %v613
      %v615 = vpop.f32.mrf.mxu0
      %v616 = vadd.f32 %v441, %v615
      %617 = vmatmul.bf16.gmra.mxu0 %v549
      %v618 = vpop.f32.mrf.mxu0
      %v619 = vadd.f32 %v446, %v618
      %v620 = vpop.f32.mrf.mxu0
      %621 = vdwg.mxu0
      %622 = vmatpush.bf16.xpose.msra.mxu0 %v597
      %623 = vmatpush.bf16.xpose.msra.mxu0 %v594
      %624 = vmatpush.bf16.xpose.msra.mxu0 %v591
      %625 = vmatpush.bf16.xpose.msra.mxu0 %v588
      %626 = vmatpush.bf16.xpose.msra.mxu0 %v585
      %627 = vmatpush.bf16.xpose.msra.mxu0 %v582
      %628 = vmatpush.bf16.xpose.msra.mxu0 %v579
      %629 = vmatpush.bf16.xpose.msra.mxu0 %v576
      %630 = vmatmul.bf16.gmra.mxu0 %v543
      %v631 = vpop.f32.mrf.mxu0
      %v632 = vadd.f32 %v426, %v631
      %v633 = vpop.f32.mrf.mxu0
      %v634 = vadd.f32 %v431, %v633
      %635 = vmatmul.bf16.gmra.mxu0 %v546
      %v636 = vpop.f32.mrf.mxu0
      %v637 = vadd.f32 %v436, %v636
      %v638 = vpop.f32.mrf.mxu0
      %v639 = vadd.f32 %v441, %v638
      %640 = vmatmul.bf16.gmra.mxu0 %v549
      %v641 = vpop.f32.mrf.mxu0
      %v642 = vadd.f32 %v446, %v641
      %v643 = vpop.f32.mrf.mxu0
      %644 = vdwg.mxu0
      %v645 = vpack.c.bf16 %v611, %v609
      %v646 = vpack.c.bf16 %v634, %v632
      %v647 = vpack.c.bf16 %v616, %v614
      %v648 = vpack.c.bf16 %v639, %v637
      %v649 = vpack.c.bf16 %v619, %v619
      %v650 = vpack.c.bf16 %v642, %v642
      %v651 = vld [vmem:[%s4] sm:$0xf]
      %v652 = vld [vmem:[%s4 + $0x4] sm:$0xf]
      %v653 = vld [vmem:[%s4 + $0x8] sm:$0xf]
      %v654 = vld [vmem:[%s4 + $0xc] sm:$0xf]
      %v655 = vld [vmem:[%s4 + $0x10] sm:$0xf]
      %v656 = vld [vmem:[%s4 + $0x14] sm:$0xf]
      %v657 = vld [vmem:[%s4 + $0x18] sm:$0xf]
      %v658 = vld [vmem:[%s4 + $0x1c] sm:$0xf]
      %v659 = vld [vmem:[%s4 + $0x20] sm:$0xf]
      %v660 = vld [vmem:[%s4 + $0x24] sm:$0xf]
      %v661 = vld [vmem:[%s4 + $0x28] sm:$0xf]
      %v662 = vld [vmem:[%s4 + $0x2c] sm:$0xf]
      %v663 = vld [vmem:[%s4 + $0x30] sm:$0xf]
      %v664 = vld [vmem:[%s4 + $0x34] sm:$0xf]
      %v665 = vld [vmem:[%s4 + $0x38] sm:$0xf]
      %v666 = vld [vmem:[%s4 + $0x3c] sm:$0xf]
      %v667 = vld [vmem:[%s4 + $0x40] sm:$0xf]
      %v668 = vld [vmem:[%s4 + $0x44] sm:$0xf]
      %v687 = vunpack.c.l.b16 %v651
      %v688 = vunpack.c.l.b16 %v652
      %v689 = vunpack.c.l.b16 %v653
      %v690 = vunpack.c.l.b16 %v654
      %v691 = vunpack.c.l.b16 %v655
      %v692 = vunpack.c.l.b16 %v656
      %v693 = vunpack.c.l.b16 %v657
      %v694 = vunpack.c.l.b16 %v658
      %v695 = vunpack.c.l.b16 %v659
      %v696 = vunpack.c.l.b16 %v660
      %v697 = vunpack.c.l.b16 %v661
      %v698 = vunpack.c.l.b16 %v662
      %v699 = vunpack.c.l.b16 %v663
      %v700 = vunpack.c.l.b16 %v664
      %v701 = vunpack.c.l.b16 %v665
      %v702 = vunpack.c.l.b16 %v666
      %v703 = vunpack.c.l.b16 %v667
      %v704 = vunpack.c.l.b16 %v668
      %v705 = vpack.c.b16 %v688, %v687
      %v706 = vpack.c.b16 %v690, %v689
      %v707 = vpack.c.b16 %v692, %v691
      %v708 = vpack.c.b16 %v694, %v693
      %v709 = vpack.c.b16 %v696, %v695
      %v710 = vpack.c.b16 %v698, %v697
      %v711 = vpack.c.b16 %v700, %v699
      %v712 = vpack.c.b16 %v702, %v701
      %v713 = vpack.c.b16 %v704, %v703
      %vm714 = vcmask 293888
      %v716 = vsel %vm714, %v705, 0
      %v719 = vsel %vm714, %v706, 0
      %v722 = vsel %vm714, %v707, 0
      %v725 = vsel %vm714, %v708, 0
      %v728 = vsel %vm714, %v709, 0
      %v731 = vsel %vm714, %v710, 0
      %v734 = vsel %vm714, %v711, 0
      %v737 = vsel %vm714, %v712, 0
      %v740 = vsel %vm714, %v713, 0
      %vm742 = vcmask 1041408
      %v744 = vsel %vm742, %v649, 0
      %v747 = vsel %vm742, %v650, 0
      %749 = vmatpush.bf16.msra.mxu0 0
      %750 = vmatpush.bf16.msra.mxu0 0
      %751 = vmatpush.bf16.msra.mxu0 0
      %752 = vmatpush.bf16.msra.mxu0 0
      %753 = vmatpush.bf16.msra.mxu0 0
      %754 = vmatpush.bf16.msra.mxu0 %v744
      %755 = vmatpush.bf16.msra.mxu0 %v647
      %756 = vmatpush.bf16.msra.mxu0 %v645
      %757 = vmatmul.bf16.gmra.mxu0 %v716
      %v758 = vpop.f32.mrf.mxu0
      %v759 = vadd.f32 0.0, %v758
      %v760 = vpop.f32.mrf.mxu0
      %v761 = vadd.f32 0.0, %v760
      %762 = vmatmul.bf16.gmra.mxu0 %v719
      %v763 = vpop.f32.mrf.mxu0
      %v764 = vadd.f32 0.0, %v763
      %v765 = vpop.f32.mrf.mxu0
      %v766 = vadd.f32 0.0, %v765
      %767 = vmatmul.bf16.gmra.mxu0 %v722
      %v768 = vpop.f32.mrf.mxu0
      %v769 = vadd.f32 0.0, %v768
      %v770 = vpop.f32.mrf.mxu0
      %v771 = vadd.f32 0.0, %v770
      %772 = vmatmul.bf16.gmra.mxu0 %v725
      %v773 = vpop.f32.mrf.mxu0
      %v774 = vadd.f32 0.0, %v773
      %v775 = vpop.f32.mrf.mxu0
      %v776 = vadd.f32 0.0, %v775
      %777 = vmatmul.bf16.gmra.mxu0 %v728
      %v778 = vpop.f32.mrf.mxu0
      %v779 = vadd.f32 0.0, %v778
      %v780 = vpop.f32.mrf.mxu0
      %v781 = vadd.f32 0.0, %v780
      %782 = vmatmul.bf16.gmra.mxu0 %v731
      %v783 = vpop.f32.mrf.mxu0
      %v784 = vadd.f32 0.0, %v783
      %v785 = vpop.f32.mrf.mxu0
      %v786 = vadd.f32 0.0, %v785
      %787 = vmatmul.bf16.gmra.mxu0 %v734
      %v788 = vpop.f32.mrf.mxu0
      %v789 = vadd.f32 0.0, %v788
      %v790 = vpop.f32.mrf.mxu0
      %v791 = vadd.f32 0.0, %v790
      %792 = vmatmul.bf16.gmra.mxu0 %v737
      %v793 = vpop.f32.mrf.mxu0
      %v794 = vadd.f32 0.0, %v793
      %v795 = vpop.f32.mrf.mxu0
      %v796 = vadd.f32 0.0, %v795
      %797 = vmatmul.bf16.gmra.mxu0 %v740
      %v798 = vpop.f32.mrf.mxu0
      %v799 = vadd.f32 0.0, %v798
      %v800 = vpop.f32.mrf.mxu0
      %v801 = vadd.f32 0.0, %v800
      %802 = vdwg.mxu0
      %803 = vmatpush.bf16.msra.mxu0 0
      %804 = vmatpush.bf16.msra.mxu0 0
      %805 = vmatpush.bf16.msra.mxu0 0
      %806 = vmatpush.bf16.msra.mxu0 0
      %807 = vmatpush.bf16.msra.mxu0 0
      %808 = vmatpush.bf16.msra.mxu0 %v747
      %809 = vmatpush.bf16.msra.mxu0 %v648
      %810 = vmatpush.bf16.msra.mxu0 %v646
      %811 = vmatmul.bf16.gmra.mxu0 %v716
      %v812 = vpop.f32.mrf.mxu0
      %v813 = vadd.f32 0.0, %v812
      %v814 = vpop.f32.mrf.mxu0
      %v815 = vadd.f32 0.0, %v814
      %816 = vmatmul.bf16.gmra.mxu0 %v719
      %v817 = vpop.f32.mrf.mxu0
      %v818 = vadd.f32 0.0, %v817
      %v819 = vpop.f32.mrf.mxu0
      %v820 = vadd.f32 0.0, %v819
      %821 = vmatmul.bf16.gmra.mxu0 %v722
      %v822 = vpop.f32.mrf.mxu0
      %v823 = vadd.f32 0.0, %v822
      %v824 = vpop.f32.mrf.mxu0
      %v825 = vadd.f32 0.0, %v824
      %826 = vmatmul.bf16.gmra.mxu0 %v725
      %v827 = vpop.f32.mrf.mxu0
      %v828 = vadd.f32 0.0, %v827
      %v829 = vpop.f32.mrf.mxu0
      %v830 = vadd.f32 0.0, %v829
      %831 = vmatmul.bf16.gmra.mxu0 %v728
      %v832 = vpop.f32.mrf.mxu0
      %v833 = vadd.f32 0.0, %v832
      %v834 = vpop.f32.mrf.mxu0
      %v835 = vadd.f32 0.0, %v834
      %836 = vmatmul.bf16.gmra.mxu0 %v731
      %v837 = vpop.f32.mrf.mxu0
      %v838 = vadd.f32 0.0, %v837
      %v839 = vpop.f32.mrf.mxu0
      %v840 = vadd.f32 0.0, %v839
      %841 = vmatmul.bf16.gmra.mxu0 %v734
      %v842 = vpop.f32.mrf.mxu0
      %v843 = vadd.f32 0.0, %v842
      %v844 = vpop.f32.mrf.mxu0
      %v845 = vadd.f32 0.0, %v844
      %846 = vmatmul.bf16.gmra.mxu0 %v737
      %v847 = vpop.f32.mrf.mxu0
      %v848 = vadd.f32 0.0, %v847
      %v849 = vpop.f32.mrf.mxu0
      %v850 = vadd.f32 0.0, %v849
      %851 = vmatmul.bf16.gmra.mxu0 %v740
      %v852 = vpop.f32.mrf.mxu0
      %v853 = vadd.f32 0.0, %v852
      %v854 = vpop.f32.mrf.mxu0
      %v855 = vadd.f32 0.0, %v854
      %856 = vdwg.mxu0
      %v857 = vld [vmem:[%s5] sm:$0xff]
      %v858 = vld [vmem:[%s5 + $0x8] sm:$0xff]
      %860 = vset.pattern.permute.xlu0 0
      %861 = vperm.xlu0 %860, %v857
      %v862 = vpop.permute.xlu0 %861
      %865 = vset.pattern.permute.xlu0 0
      %866 = vperm.xlu0 %865, %v858
      %v867 = vpop.permute.xlu0 %866
      %v869 = vadd.f32 %v862, %v779
      %v870 = vadd.f32 %v862, %v833
      %v871 = vadd.f32 %v867, %v781
      %v872 = vadd.f32 %v867, %v835
      %873 = vrot.lane.b32.xlu0 %v759, 17
      %v874 = vpop.permute.xlu0 %873
      %875 = vrot.lane.b32.xlu0 %v761, 17
      %v876 = vpop.permute.xlu0 %875
      %877 = vrot.lane.b32.xlu0 %v813, 17
      %v878 = vpop.permute.xlu0 %877
      %879 = vrot.lane.b32.xlu0 %v815, 17
      %v880 = vpop.permute.xlu0 %879
      %v881 = vlaneseq
      %v882 = vand.u32 %v881, 127
      %vm883 = vcmp.lt.s32.totalorder %v882, 17
      %v884 = vsel %vm883, %v874, %v878
      %v885 = vsel %vm883, %v876, %v880
      %v886 = vsel %vm883, %v878, %v874
      %v887 = vsel %vm883, %v880, %v876
      %v888 = vld [vmem:[%s9] ss:$8 sm:$0x3]
      %v890 = vperm.slane %v888, 0
      %v891 = vperm.slane %v888, 1
      %v894 = vmul.f32 %v886, %v890
      %v895 = vmul.f32 %v884, %v891
      %v896 = vmul.f32 %v887, %v890
      %v897 = vmul.f32 %v885, %v891
      %v898 = vadd.f32 %v869, %v894
      %v899 = vadd.f32 %v870, %v895
      %v900 = vadd.f32 %v871, %v896
      %v901 = vadd.f32 %v872, %v897
      %902 = vrot.lane.b32.xlu0 %v764, 16
      %v903 = vpop.permute.xlu0 %902
      %904 = vrot.lane.b32.xlu0 %v766, 16
      %v905 = vpop.permute.xlu0 %904
      %906 = vrot.lane.b32.xlu0 %v818, 16
      %v907 = vpop.permute.xlu0 %906
      %908 = vrot.lane.b32.xlu0 %v820, 16
      %v909 = vpop.permute.xlu0 %908
      %vm910 = vcmp.lt.s32.totalorder %v882, 16
      %v911 = vsel %vm910, %v903, %v907
      %v912 = vsel %vm910, %v905, %v909
      %v913 = vsel %vm910, %v907, %v903
      %v914 = vsel %vm910, %v909, %v905
      %s915 = scalar_lea.vmem %s9, 1
      %v916 = vld [vmem:[%s915] ss:$8 sm:$0x3]
      %v918 = vperm.slane %v916, 0
      %v919 = vperm.slane %v916, 1
      %v922 = vmul.f32 %v913, %v918
      %v923 = vmul.f32 %v911, %v919
      %v924 = vmul.f32 %v914, %v918
      %v925 = vmul.f32 %v912, %v919
      %v926 = vadd.f32 %v898, %v922
      %v927 = vadd.f32 %v899, %v923
      %v928 = vadd.f32 %v900, %v924
      %v929 = vadd.f32 %v901, %v925
      %930 = vrot.lane.b32.xlu0 %v769, 15
      %v931 = vpop.permute.xlu0 %930
      %932 = vrot.lane.b32.xlu0 %v771, 15
      %v933 = vpop.permute.xlu0 %932
      %934 = vrot.lane.b32.xlu0 %v823, 15
      %v935 = vpop.permute.xlu0 %934
      %936 = vrot.lane.b32.xlu0 %v825, 15
      %v937 = vpop.permute.xlu0 %936
      %vm938 = vcmp.lt.s32.totalorder %v882, 15
      %v939 = vsel %vm938, %v931, %v935
      %v940 = vsel %vm938, %v933, %v937
      %v941 = vsel %vm938, %v935, %v931
      %v942 = vsel %vm938, %v937, %v933
      %s943 = scalar_lea.vmem %s9, 2
      %v944 = vld [vmem:[%s943] ss:$8 sm:$0x3]
      %v946 = vperm.slane %v944, 0
      %v947 = vperm.slane %v944, 1
      %v950 = vmul.f32 %v941, %v946
      %v951 = vmul.f32 %v939, %v947
      %v952 = vmul.f32 %v942, %v946
      %v953 = vmul.f32 %v940, %v947
      %v954 = vadd.f32 %v926, %v950
      %v955 = vadd.f32 %v927, %v951
      %v956 = vadd.f32 %v928, %v952
      %v957 = vadd.f32 %v929, %v953
      %958 = vrot.lane.b32.xlu0 %v774, 1
      %v959 = vpop.permute.xlu0 %958
      %960 = vrot.lane.b32.xlu0 %v776, 1
      %v961 = vpop.permute.xlu0 %960
      %962 = vrot.lane.b32.xlu0 %v828, 1
      %v963 = vpop.permute.xlu0 %962
      %964 = vrot.lane.b32.xlu0 %v830, 1
      %v965 = vpop.permute.xlu0 %964
      %vm966 = vcmp.lt.s32.totalorder %v882, 1
      %v967 = vsel %vm966, %v959, %v963
      %v968 = vsel %vm966, %v961, %v965
      %v969 = vsel %vm966, %v963, %v959
      %v970 = vsel %vm966, %v965, %v961
      %s971 = scalar_lea.vmem %s9, 3
      %v972 = vld [vmem:[%s971] ss:$8 sm:$0x3]
      %v974 = vperm.slane %v972, 0
      %v975 = vperm.slane %v972, 1
      %v978 = vmul.f32 %v969, %v974
      %v979 = vmul.f32 %v967, %v975
      %v980 = vmul.f32 %v970, %v974
      %v981 = vmul.f32 %v968, %v975
      %v982 = vadd.f32 %v954, %v978
      %v983 = vadd.f32 %v955, %v979
      %v984 = vadd.f32 %v956, %v980
      %v985 = vadd.f32 %v957, %v981
      %986 = vrot.lane.b32.xlu0 %v784, 127
      %v987 = vpop.permute.xlu0 %986
      %988 = vrot.lane.b32.xlu0 %v786, 127
      %v989 = vpop.permute.xlu0 %988
      %990 = vrot.lane.b32.xlu0 %v838, 127
      %v991 = vpop.permute.xlu0 %990
      %992 = vrot.lane.b32.xlu0 %v840, 127
      %v993 = vpop.permute.xlu0 %992
      %vm994 = vcmp.lt.s32.totalorder %v882, 127
      %v995 = vsel %vm994, %v987, %v991
      %v996 = vsel %vm994, %v989, %v993
      %v997 = vsel %vm994, %v991, %v987
      %v998 = vsel %vm994, %v993, %v989
      %s999 = scalar_lea.vmem %s9, 5
      %v1000 = vld [vmem:[%s999] ss:$8 sm:$0x3]
      %v1002 = vperm.slane %v1000, 0
      %v1003 = vperm.slane %v1000, 1
      %v1006 = vmul.f32 %v995, %v1002
      %v1007 = vmul.f32 %v997, %v1003
      %v1008 = vmul.f32 %v996, %v1002
      %v1009 = vmul.f32 %v998, %v1003
      %v1010 = vadd.f32 %v982, %v1006
      %v1011 = vadd.f32 %v983, %v1007
      %v1012 = vadd.f32 %v984, %v1008
      %v1013 = vadd.f32 %v985, %v1009
      %1014 = vrot.lane.b32.xlu0 %v789, 113
      %v1015 = vpop.permute.xlu0 %1014
      %1016 = vrot.lane.b32.xlu0 %v791, 113
      %v1017 = vpop.permute.xlu0 %1016
      %1018 = vrot.lane.b32.xlu0 %v843, 113
      %v1019 = vpop.permute.xlu0 %1018
      %1020 = vrot.lane.b32.xlu0 %v845, 113
      %v1021 = vpop.permute.xlu0 %1020
      %vm1022 = vcmp.lt.s32.totalorder %v882, 113
      %v1023 = vsel %vm1022, %v1015, %v1019
      %v1024 = vsel %vm1022, %v1017, %v1021
      %v1025 = vsel %vm1022, %v1019, %v1015
      %v1026 = vsel %vm1022, %v1021, %v1017
      %s1027 = scalar_lea.vmem %s9, 6
      %v1028 = vld [vmem:[%s1027] ss:$8 sm:$0x3]
      %v1030 = vperm.slane %v1028, 0
      %v1031 = vperm.slane %v1028, 1
      %v1034 = vmul.f32 %v1023, %v1030
      %v1035 = vmul.f32 %v1025, %v1031
      %v1036 = vmul.f32 %v1024, %v1030
      %v1037 = vmul.f32 %v1026, %v1031
      %v1038 = vadd.f32 %v1010, %v1034
      %v1039 = vadd.f32 %v1011, %v1035
      %v1040 = vadd.f32 %v1012, %v1036
      %v1041 = vadd.f32 %v1013, %v1037
      %1042 = vrot.lane.b32.xlu0 %v794, 112
      %v1043 = vpop.permute.xlu0 %1042
      %1044 = vrot.lane.b32.xlu0 %v796, 112
      %v1045 = vpop.permute.xlu0 %1044
      %1046 = vrot.lane.b32.xlu0 %v848, 112
      %v1047 = vpop.permute.xlu0 %1046
      %1048 = vrot.lane.b32.xlu0 %v850, 112
      %v1049 = vpop.permute.xlu0 %1048
      %vm1050 = vcmp.lt.s32.totalorder %v882, 112
      %v1051 = vsel %vm1050, %v1043, %v1047
      %v1052 = vsel %vm1050, %v1045, %v1049
      %v1053 = vsel %vm1050, %v1047, %v1043
      %v1054 = vsel %vm1050, %v1049, %v1045
      %s1055 = scalar_lea.vmem %s9, 7
      %v1056 = vld [vmem:[%s1055] ss:$8 sm:$0x3]
      %v1058 = vperm.slane %v1056, 0
      %v1059 = vperm.slane %v1056, 1
      %v1062 = vmul.f32 %v1051, %v1058
      %v1063 = vmul.f32 %v1053, %v1059
      %v1064 = vmul.f32 %v1052, %v1058
      %v1065 = vmul.f32 %v1054, %v1059
      %v1066 = vadd.f32 %v1038, %v1062
      %v1067 = vadd.f32 %v1039, %v1063
      %v1068 = vadd.f32 %v1040, %v1064
      %v1069 = vadd.f32 %v1041, %v1065
      %1070 = vrot.lane.b32.xlu0 %v799, 111
      %v1071 = vpop.permute.xlu0 %1070
      %1072 = vrot.lane.b32.xlu0 %v801, 111
      %v1073 = vpop.permute.xlu0 %1072
      %1074 = vrot.lane.b32.xlu0 %v853, 111
      %v1075 = vpop.permute.xlu0 %1074
      %1076 = vrot.lane.b32.xlu0 %v855, 111
      %v1077 = vpop.permute.xlu0 %1076
      %vm1078 = vcmp.lt.s32.totalorder %v882, 111
      %v1079 = vsel %vm1078, %v1071, %v1075
      %v1080 = vsel %vm1078, %v1073, %v1077
      %v1081 = vsel %vm1078, %v1075, %v1071
      %v1082 = vsel %vm1078, %v1077, %v1073
      %s1083 = scalar_lea.vmem %s9, 16
      %v1084 = vld [vmem:[%s1083] ss:$8 sm:$0x3]
      %v1086 = vperm.slane %v1084, 0
      %v1087 = vperm.slane %v1084, 1
      %v1090 = vmul.f32 %v1079, %v1086
      %v1091 = vmul.f32 %v1081, %v1087
      %v1092 = vmul.f32 %v1080, %v1086
      %v1093 = vmul.f32 %v1082, %v1087
      %v1094 = vadd.f32 %v1066, %v1090
      %v1095 = vadd.f32 %v1067, %v1091
      %v1096 = vadd.f32 %v1068, %v1092
      %v1097 = vadd.f32 %v1069, %v1093
      %v1098 = vld [vmem:[%s369] sm:$0xff]
      %v1099 = vld [vmem:[%s369 + $0x8] sm:$0xff]
      %v1100 = vld [vmem:[%s369 + $0x10] sm:$0xff]
      %v1101 = vld [vmem:[%s369 + $0x18] sm:$0xff]
      %v1102 = vld [vmem:[%s369 + $0x20] sm:$0xff]
      %v1103 = vld [vmem:[%s369 + $0x28] sm:$0xff]
      %v1104 = vunpack.c.l.bf16 %v1098
      %v1105 = vunpack.c.h.bf16 %v1098
      %v1106 = vunpack.c.l.bf16 %v1099
      %v1107 = vunpack.c.h.bf16 %v1099
      %v1108 = vunpack.c.l.bf16 %v1100
      %v1109 = vunpack.c.h.bf16 %v1100
      %v1110 = vunpack.c.l.bf16 %v1101
      %v1111 = vunpack.c.h.bf16 %v1101
      %v1112 = vmul.f32 %v1104, %v1104
      %v1113 = vmul.f32 %v1105, %v1105
      %v1114 = vmul.f32 %v1106, %v1106
      %v1115 = vmul.f32 %v1107, %v1107
      %v1116 = vadd.f32 %v1112, %v1113
      %1117 = vadd.xlane.f32.xlu0 %v1116
      %v1118 = vpop.xlane.xlu0 %1117
      %v1119 = vadd.f32 %v1114, %v1115
      %1120 = vadd.xlane.f32.xlu0 %v1119
      %v1121 = vpop.xlane.xlu0 %1120
      %v1122 = vmax.f32 %v1118, 1e-24
      %v1123 = vmax.f32 %v1121, 1e-24
      %v1124 = vrsqrt.pop %v1122
      %v1125 = vmul.f32 %v1124, %v1122
      %v1126 = vmul.f32 %v1125, %v1124
      %v1127 = vmul.f32 0.5, %v1126
      %v1128 = vsub.f32 1.5, %v1127
      %v1129 = vmul.f32 %v1124, %v1128
      %vm1130 = vweird.f32 %v1122
      %vm1131 = vweird.f32 %v1124
      %vm1132 = vmor %vm1130, %vm1131
      %v1133 = vsel %vm1132, %v1124, %v1129
      %v1134 = vrsqrt.pop %v1123
      %v1135 = vmul.f32 %v1134, %v1123
      %v1136 = vmul.f32 %v1135, %v1134
      %v1137 = vmul.f32 0.5, %v1136
      %v1138 = vsub.f32 1.5, %v1137
      %v1139 = vmul.f32 %v1134, %v1138
      %vm1140 = vweird.f32 %v1123
      %vm1141 = vweird.f32 %v1134
      %vm1142 = vmor %vm1140, %vm1141
      %v1143 = vsel %vm1142, %v1134, %v1139
      %v1144 = vmul.f32 %v1104, %v1133
      %v1145 = vmul.f32 %v1105, %v1133
      %v1146 = vmul.f32 %v1106, %v1143
      %v1147 = vmul.f32 %v1107, %v1143
      %v1148 = vpack.c.bf16 %v1146, %v1144
      %v1149 = vpack.c.bf16 %v1147, %v1145
      %v1150 = vmul.f32 %v1108, %v1108
      %v1151 = vmul.f32 %v1109, %v1109
      %v1152 = vmul.f32 %v1110, %v1110
      %v1153 = vmul.f32 %v1111, %v1111
      %v1154 = vadd.f32 %v1150, %v1151
      %1155 = vadd.xlane.f32.xlu0 %v1154
      %v1156 = vpop.xlane.xlu0 %1155
      %v1157 = vadd.f32 %v1152, %v1153
      %1158 = vadd.xlane.f32.xlu0 %v1157
      %v1159 = vpop.xlane.xlu0 %1158
      %v1160 = vmax.f32 %v1156, 1e-24
      %v1161 = vmax.f32 %v1159, 1e-24
      %v1162 = vrsqrt.pop %v1160
      %v1163 = vmul.f32 %v1162, %v1160
      %v1164 = vmul.f32 %v1163, %v1162
      %v1165 = vmul.f32 0.5, %v1164
      %v1166 = vsub.f32 1.5, %v1165
      %v1167 = vmul.f32 %v1162, %v1166
      %vm1168 = vweird.f32 %v1160
      %vm1169 = vweird.f32 %v1162
      %vm1170 = vmor %vm1168, %vm1169
      %v1171 = vsel %vm1170, %v1162, %v1167
      %v1172 = vrsqrt.pop %v1161
      %v1173 = vmul.f32 %v1172, %v1161
      %v1174 = vmul.f32 %v1173, %v1172
      %v1175 = vmul.f32 0.5, %v1174
      %v1176 = vsub.f32 1.5, %v1175
      %v1177 = vmul.f32 %v1172, %v1176
      %vm1178 = vweird.f32 %v1161
      %vm1179 = vweird.f32 %v1172
      %vm1180 = vmor %vm1178, %vm1179
      %v1181 = vsel %vm1180, %v1172, %v1177
      %v1182 = vmul.f32 %v1108, %v1171
      %v1183 = vmul.f32 %v1109, %v1171
      %v1184 = vmul.f32 %v1110, %v1181
      %v1185 = vmul.f32 %v1111, %v1181
      %v1186 = vpack.c.bf16 %v1184, %v1182
      %v1187 = vpack.c.bf16 %v1185, %v1183
      %1188 = vmatpush.bf16.xpose.msra.mxu0 0
      %1189 = vmatpush.bf16.xpose.msra.mxu0 0
      %1190 = vmatpush.bf16.xpose.msra.mxu0 0
      %1191 = vmatpush.bf16.xpose.msra.mxu0 0
      %1192 = vmatpush.bf16.xpose.msra.mxu0 0
      %1193 = vmatpush.bf16.xpose.msra.mxu0 0
      %1194 = vmatpush.bf16.xpose.msra.mxu0 0
      %1195 = vmatpush.bf16.xpose.msra.mxu0 %v1186
      %1196 = vmatmul.bf16.gmra.mxu0 %v1148
      %v1197 = vpop.f32.mrf.mxu0
      %v1198 = vadd.f32 0.0, %v1197
      %v1199 = vpop.f32.mrf.mxu0
      %v1200 = vadd.f32 0.0, %v1199
      %1201 = vdwg.mxu0
      %1202 = vmatpush.bf16.xpose.msra.mxu0 0
      %1203 = vmatpush.bf16.xpose.msra.mxu0 0
      %1204 = vmatpush.bf16.xpose.msra.mxu0 0
      %1205 = vmatpush.bf16.xpose.msra.mxu0 0
      %1206 = vmatpush.bf16.xpose.msra.mxu0 0
      %1207 = vmatpush.bf16.xpose.msra.mxu0 0
      %1208 = vmatpush.bf16.xpose.msra.mxu0 0
      %1209 = vmatpush.bf16.xpose.msra.mxu0 %v1187
      %1210 = vmatmul.bf16.gmra.mxu0 %v1149
      %v1211 = vpop.f32.mrf.mxu0
      %v1212 = vadd.f32 %v1198, %v1211
      %v1213 = vpop.f32.mrf.mxu0
      %v1214 = vadd.f32 %v1200, %v1213
      %1215 = vdwg.mxu0
      %v1216 = vld [vmem:[%s7] sm:$0xff]
      %v1217 = vld [vmem:[%s7 + $0x8] sm:$0xff]
      %1219 = vset.pattern.permute.xlu0 0
      %1220 = vperm.xlu0 %1219, %v1216
      %v1221 = vpop.permute.xlu0 %1220
      %1224 = vset.pattern.permute.xlu0 0
      %1225 = vperm.xlu0 %1224, %v1217
      %v1226 = vpop.permute.xlu0 %1225
      %v1228 = vmul.f32 %v1212, %v1221
      %v1229 = vmul.f32 %v1214, %v1226
      %v1230 = vld [vmem:[%s8] sm:$0xff]
      %v1231 = vld [vmem:[%s8 + $0x8] sm:$0xff]
      %v1232 = vadd.f32 %v1228, %v1230
      %v1233 = vadd.f32 %v1229, %v1231
      %vm1234 = vcmask 130048
      %v1235 = vsel %vm1234, %v1232, -inf
      %1236 = vmax.xlane.f32.xlu0 %v1235
      %v1237 = vpop.xlane.xlu0 %1236
      %v1238 = vsel %vm1234, %v1233, -inf
      %1239 = vmax.xlane.f32.xlu0 %v1238
      %v1240 = vpop.xlane.xlu0 %1239
      %v1241 = vsub.f32 %v1232, %v1237
      %v1242 = vsub.f32 %v1233, %v1240
      %v1243 = vmul.f32 %v1241, 1.442695
      %v1244 = vpow.pop %v1243
      %v1245 = vmul.f32 %v1242, 1.442695
      %v1246 = vpow.pop %v1245
      %v1247 = vsel %vm1234, %v1244, 0.0
      %1248 = vadd.xlane.f32.xlu0 %v1247
      %v1249 = vpop.xlane.xlu0 %1248
      %v1250 = vsel %vm1234, %v1246, 0.0
      %1251 = vadd.xlane.f32.xlu0 %v1250
      %v1252 = vpop.xlane.xlu0 %1251
      %v1253 = vrcp.pop %v1249
      %v1254 = vrcp.pop %v1252
      %v1255 = vmul.f32 %v1244, %v1253
      %v1256 = vmul.f32 %v1246, %v1254
      %v1257 = vld [vmem:[%s6] sm:$0xf]
      %v1258 = vld [vmem:[%s6 + $0x4] sm:$0xf]
      %v1259 = vpack.c.bf16 %v1256, %v1255
      %v1262 = vunpack.c.l.b16 %v1257
      %v1263 = vunpack.c.l.b16 %v1258
      %v1264 = vpack.c.b16 %v1263, %v1262
      %v1266 = vsel %vm1234, %v1264, 0
      %1268 = vmatpush.bf16.msra.mxu0 0
      %1269 = vmatpush.bf16.msra.mxu0 0
      %1270 = vmatpush.bf16.msra.mxu0 0
      %1271 = vmatpush.bf16.msra.mxu0 0
      %1272 = vmatpush.bf16.msra.mxu0 0
      %1273 = vmatpush.bf16.msra.mxu0 0
      %1274 = vmatpush.bf16.msra.mxu0 0
      %1275 = vmatpush.bf16.msra.mxu0 %v1259
      %1276 = vmatmul.bf16.gmra.mxu0 %v1266
      %v1277 = vpop.f32.mrf.mxu0
      %v1278 = vadd.f32 0.0, %v1277
      %v1279 = vpop.f32.mrf.mxu0
      %v1280 = vadd.f32 0.0, %v1279
      %1281 = vdwg.mxu0
      %v1282 = vpack.c.bf16 %v1280, %v1278
      %v1285 = vunpack.c.l.b16 %v1102
      %v1286 = vunpack.c.h.b16 %v1102
      %v1287 = vunpack.c.l.b16 %v1103
      %v1288 = vunpack.c.h.b16 %v1103
      %v1289 = vpack.c.b16 %v1287, %v1285
      %v1290 = vpack.c.b16 %v1288, %v1286
      %v1294 = vsel %vm1234, %v1282, 0
      %1296 = vmatpush.bf16.msra.mxu0 0
      %1297 = vmatpush.bf16.msra.mxu0 0
      %1298 = vmatpush.bf16.msra.mxu0 0
      %1299 = vmatpush.bf16.msra.mxu0 0
      %1300 = vmatpush.bf16.msra.mxu0 0
      %1301 = vmatpush.bf16.msra.mxu0 0
      %1302 = vmatpush.bf16.msra.mxu0 0
      %1303 = vmatpush.bf16.msra.mxu0 %v1289
      %1304 = vmatmul.bf16.gmra.mxu0 %v1294
      %v1305 = vpop.f32.mrf.mxu0
      %v1306 = vadd.f32 %v1094, %v1305
      %v1307 = vpop.f32.mrf.mxu0
      %v1308 = vadd.f32 %v1096, %v1307
      %1309 = vdwg.mxu0
      %1310 = vmatpush.bf16.msra.mxu0 0
      %1311 = vmatpush.bf16.msra.mxu0 0
      %1312 = vmatpush.bf16.msra.mxu0 0
      %1313 = vmatpush.bf16.msra.mxu0 0
      %1314 = vmatpush.bf16.msra.mxu0 0
      %1315 = vmatpush.bf16.msra.mxu0 0
      %1316 = vmatpush.bf16.msra.mxu0 0
      %1317 = vmatpush.bf16.msra.mxu0 %v1290
      %1318 = vmatmul.bf16.gmra.mxu0 %v1294
      %v1319 = vpop.f32.mrf.mxu0
      %v1320 = vadd.f32 %v1095, %v1319
      %v1321 = vpop.f32.mrf.mxu0
      %v1322 = vadd.f32 %v1097, %v1321
      %1323 = vdwg.mxu0
      %1324 = vst [vmem:[%s379] sm:$0xff] %v1306
      %1325 = vst [vmem:[%s379 + $0x8] sm:$0xff] %v1320
      %1326 = vst [vmem:[%s379 + $0x10] sm:$0xff] %v1308
      %1327 = vst [vmem:[%s379 + $0x18] sm:$0xff] %v1322
      %p1328 = scmp.lt.s32.totalorder %s21, 1
      %s1329 = scalar_select %p1328, %s21, 1
      %s1330 = smul.addr %s1329, 4
      %s1331 = smul.addr %s1330, 8
      %s1332 = scalar_lea.vmem %s10, %s1331
      // Predicated region
      $region61: #{cafm_forward.3} parent=59 // pred_check
        %p1333 = pneg %p259
      $region62: #{cafm_forward.3} parent=59 // pred_check_branch
        %1335 = sbr.rel (%p1333) target = $region64
      $region63: #{cafm_forward.3} parent=59 // pred_region
        _
      $region64: #{cafm_forward.3} parent=59 // pred_fallthru
        _
    $region60: #{cafm_forward.3} parent=5 // pred_fallthru
      _
    %p1336 = scmp.le.s32.totalorder 2, %s16
    // Predicated region
    $region65: #{cafm_forward.3} parent=5 // pred_check
      %p1337 = pneg %p1336
    $region66: #{cafm_forward.3} parent=5 // pred_check_branch
      %1339 = sbr.rel (%p1337) target = $region68
    $region67: #{cafm_forward.3} parent=5 // pred_region
      %s1340 = ssub.s32 %s16, 2
      // Predicated region
      $region69: #{cafm_forward.3} parent=67 // pred_check
        %p1341 = pneg %p265
      $region70: #{cafm_forward.3} parent=67 // pred_check_branch
        %1343 = sbr.rel (%p1341) target = $region72
      $region71: #{cafm_forward.3} parent=67 // pred_region
        %p1344 = scmp.lt.s32.totalorder %s22, 1
        %s1345 = scalar_select %p1344, %s22, 1
        %s1346 = smul.addr %s1345, 4
        %s1347 = smul.addr %s1346, 8
        %s1348 = scalar_lea.vmem %s10, %s1347
      $region72: #{cafm_forward.3} parent=67 // pred_fallthru
        _
    $region68: #{cafm_forward.3} parent=5 // pred_fallthru
      _
  $region6: #{cafm_forward.3} parent=0 // loop_footer
    %s20 = sadd.s32 1, %s16
  $region7: #{cafm_forward.3} parent=0 // loop_footer_branch
    %15 = sbr.rel target = $region3
  $region8: #{cafm_forward.3} parent=0 // loop_exit
    _

</llo_original>
